<compile_context>
chip_gen: v6e
topology: v6e:2x2x1
jax: 0.10.0
libtpu: 0.0.40
codegen_flags: <defaults>
</compile_context>

<pallas_src>
import functools

import jax
import jax.numpy as jnp
from jax import lax
from jax.experimental import pallas as pl
from jax.experimental.pallas import tpu as pltpu


def _round_up(x, m):
    return ((x + m - 1) // m) * m


# ------------------------------ Pallas kernel -------------------------------

def _conv_tap_kernel(*refs, ho, wo, pitch, stride, shortcut):
    """Grid step = (batch n, output depth plane, depth tap kd).

    For each in-plane tap (kh, kw) the required inputs form one *contiguous*
    row window of the flattened (H+2)*(W+2) padded plane, so every tap is a
    single (rows, Cin) @ (Cin, Cp) MXU matmul accumulated into an f32 VMEM
    scratch laid out with the same padded row pitch (junk rows never read).

    refs (by `shortcut`):
      "none": x_ref, w_ref, t_ref, o_ref, acc_ref
      "id"  : x_ref, w_ref, t_ref, r_ref, o_ref, acc_ref
      "proj": x_ref, w_ref, t_ref, xs_ref, wsc_ref, o_ref, acc_ref

      x_ref  : ((H+2)*(W+2), Cin) bf16  flattened padded input plane (one kd)
      w_ref  : (27, Cin, Cp) bf16       BN-scale-folded conv weights (all taps)
      t_ref  : (1, Cp) f32              BN shift (conv bias folded in)
      r_ref  : (Ho*Wo, Cp) f32          identity residual
      xs_ref : (Ho*Wo, Cin0) bf16       input rows for the 1x1x1 projection
      wsc_ref: (Cin0, Cp) bf16          BN-scale-folded projection weights
      o_ref  : (Ho, Wo, Cp) bf16        output plane
      acc_ref: (acc_rows, Cp) f32       accumulator scratch (padded pitch)
    """
    if shortcut == "proj":
        x_ref, w_ref, t_ref, xs_ref, wsc_ref, o_ref, acc_ref = refs
    elif shortcut == "id":
        x_ref, w_ref, t_ref, r_ref, o_ref, acc_ref = refs
    else:
        x_ref, w_ref, t_ref, o_ref, acc_ref = refs

    kd = pl.program_id(2)
    acc_rows = acc_ref.shape[0]

    @pl.when(kd == 0)
    def _init():
        acc_ref[...] = jnp.zeros_like(acc_ref)

    # 9 in-plane taps: one contiguous-window bf16 matmul each, f32 accumulate.
    acc = acc_ref[...]
    for j in range(9):
        kh, kw = divmod(j, 3)
        start = kh * pitch + kw
        patch = x_ref[start:start + acc_rows, :]          # (acc_rows, Cin) bf16
        acc += jnp.dot(patch, w_ref[kd * 9 + j],
                       preferred_element_type=jnp.float32)
    acc_ref[...] = acc

    @pl.when(kd == pl.num_programs(2) - 1)
    def _finalize():
        if shortcut == "proj":
            # fused 1x1x1-conv + BN shortcut
            res = jnp.dot(xs_ref[...], wsc_ref[...],
                          preferred_element_type=jnp.float32)   # (Ho*Wo, Cp)
        for i in range(ho):
            row_start = i * stride * pitch
            if stride == 1:
                y = acc_ref[row_start:row_start + wo, :]
            else:
                # TODO(synk): stride > 1 path implemented but not exercised by
                # the test below.
                y = acc_ref[pl.ds(row_start, wo, stride), :]
            y = y + t_ref[...]
            if shortcut == "id":
                y = y + r_ref[i * wo:(i + 1) * wo, :]
            elif shortcut == "proj":
                y = y + res[i * wo:(i + 1) * wo, :]
            o_ref[i] = jnp.maximum(y, 0.0).astype(o_ref.dtype)


# ------------------------------- pallas wrapper ------------------------------

def _conv_pass(x_pad, w_taps, shift, *, do, ho, wo, pitch, stride=1,
               shortcut="none", resid=None, w_short=None):
    """One fused conv3x3x3 + BN shift (+ shortcut) + ReLU pass.

    x_pad : (N, D_in+2, (H_in+2)*(W_in+2), Cin) bf16, spatially padded
    w_taps: (27, Cin, Cp) bf16, BN-scale-folded
    shift : (1, Cp) f32
    resid : "id"  -> (N, Do, Ho*Wo, Cp)   f32
            "proj"-> (N, Do, Ho*Wo, Cin0) bf16
    w_short: (Cin0, Cp) bf16 ("proj" only)
    Returns (N, Do, Ho, Wo, Cp) bf16.
    """
    n, _, plane_rows, cin = x_pad.shape
    cp = w_taps.shape[-1]
    acc_rows = (ho - 1) * stride * pitch + (wo - 1) * stride + 1

    kernel = functools.partial(_conv_tap_kernel, ho=ho, wo=wo, pitch=pitch,
                               stride=stride, shortcut=shortcut)

    in_specs = [
        pl.BlockSpec((None, None, plane_rows, cin),
                     lambda i, j, k: (i, j * stride + k, 0, 0)),
        # grid-invariant: weights are DMA'd once and stay resident in VMEM
        pl.BlockSpec((27, cin, cp), lambda i, j, k: (0, 0, 0)),
        pl.BlockSpec((1, cp), lambda i, j, k: (0, 0)),
    ]
    args = [x_pad, w_taps, shift]
    if shortcut == "id":
        in_specs.append(pl.BlockSpec((None, None, ho * wo, cp),
                                     lambda i, j, k: (i, j, 0, 0)))
        args.append(resid)
    elif shortcut == "proj":
        cin0 = resid.shape[-1]
        in_specs.append(pl.BlockSpec((None, None, ho * wo, cin0),
                                     lambda i, j, k: (i, j, 0, 0)))
        in_specs.append(pl.BlockSpec((cin0, cp), lambda i, j, k: (0, 0)))
        args.extend([resid, w_short])

    return pl.pallas_call(
        kernel,
        out_shape=jax.ShapeDtypeStruct((n, do, ho, wo, cp), jnp.bfloat16),
        grid_spec=pltpu.PrefetchScalarGridSpec(
            num_scalar_prefetch=0,
            grid=(n, do, 3),
            in_specs=in_specs,
            out_specs=pl.BlockSpec((None, None, ho, wo, cp),
                                   lambda i, j, k: (i, j, 0, 0, 0)),
            scratch_shapes=[pltpu.VMEM((acc_rows, cp), jnp.float32)],
        ),
        compiler_params=pltpu.CompilerParams(
            # plane axes shard across TensorCores; depth taps are a serial
            # reduction into the VMEM accumulator (reduction axis last).
            dimension_semantics=("parallel", "parallel", "arbitrary"),
            # generous but safely under v7x's 64 MiB physical VMEM.
            vmem_limit_bytes=48 * 1024 * 1024,
        ),
    )(*args)


# ------------------------------ PostRes forward ------------------------------

def post_res_forward(x, params, stride=1, eps=1e-5):
    """x: (N, Cin, D, H, W) float32 (NCDHW, like PyTorch). Returns NCDHW f32."""
    n, cin, d, h, w = x.shape
    cout = params["w1"].shape[-1]
    cp = _round_up(cout, 128)                      # lane-dense output channels

    do = (d - 1) // stride + 1
    ho = (h - 1) // stride + 1
    wo = (w - 1) // stride + 1

    def fold(prefix, bias):
        s = params[prefix + "_g"] / jnp.sqrt(params[prefix + "_v"] + eps)
        t = (bias - params[prefix + "_m"]) * s + params[prefix + "_b"]
        return s.astype(jnp.float32), t.astype(jnp.float32)

    def prep_shift(t):
        return jnp.pad(t, (0, cp - cout)).reshape(1, cp).astype(jnp.float32)

    s1, t1 = fold("bn1", params["b1"])
    s2, t2 = fold("bn2", params["b2"])

    # ---- conv1: 3x3x3, padding 1, `stride`, + bn1 + relu -------------------
    xl = jnp.transpose(x, (0, 2, 3, 4, 1))                        # NDHWC f32
    x_pad = jnp.pad(xl, ((0, 0), (1, 1), (1, 1), (1, 1), (0, 0)))
    x_pad = x_pad.reshape(n, d + 2, (h + 2) * (w + 2), cin).astype(jnp.bfloat16)

    w1 = (params["w1"] * s1).reshape(27, cin, cout)               # BN scale folded
    w1k = jnp.pad(w1, ((0, 0), (0, 0), (0, cp - cout))).astype(jnp.bfloat16)

    h1 = _conv_pass(x_pad, w1k, prep_shift(t1),
                    do=do, ho=ho, wo=wo, pitch=w + 2, stride=stride)
    # h1: (N, Do, Ho, Wo, Cp) bf16; padded channels are exactly zero.

    # ---- conv2: 3x3x3, padding 1, stride 1, + bn2 + shortcut + relu --------
    w2 = (params["w2"] * s2).reshape(27, cout, cout)
    w2k = jnp.pad(w2, ((0, 0), (0, cp - cout), (0, cp - cout))
                  ).astype(jnp.bfloat16)

    h1p = jnp.pad(h1, ((0, 0), (1, 1), (1, 1), (1, 1), (0, 0)))
    h1p = h1p.reshape(n, do + 2, (ho + 2) * (wo + 2), cp)

    if stride != 1 or cin != cout:
        ssc, tsc = fold("bnsc", params["bsc"])
        wsck = jnp.pad(params["wsc"] * ssc,
                       ((0, 0), (0, cp - cout))).astype(jnp.bfloat16)
        xs = xl[:, ::stride, ::stride, ::stride, :].reshape(
            n, do, ho * wo, cin).astype(jnp.bfloat16)
        out = _conv_pass(h1p, w2k, prep_shift(t2 + tsc),
                         do=do, ho=ho, wo=wo, pitch=wo + 2, stride=1,
                         shortcut="proj", resid=xs, w_short=wsck)
    else:
        r = jnp.pad(xl.reshape(n, d, h * w, cin),
                    ((0, 0), (0, 0), (0, 0), (0, cp - cout)))
        out = _conv_pass(h1p, w2k, prep_shift(t2),
                         do=do, ho=ho, wo=wo, pitch=wo + 2, stride=1,
                         shortcut="id", resid=r)

    out = out[..., :cout].astype(jnp.float32)                     # (N,Do,Ho,Wo,Cout)
    return jnp.transpose(out, (0, 4, 1, 2, 3))                    # back to NCDHW


# -------------------------- params / pure-JAX reference ----------------------

def make_params(key, n_in, n_out, stride=1):
    ks = list(jax.random.split(key, 24))
    it = iter(ks)

    def nrm(shape, s=0.1):
        return s * jax.random.normal(next(it), shape, jnp.float32)

    p = {
        "w1": nrm((3, 3, 3, n_in, n_out)),
        "b1": nrm((n_out,), 0.05),
        "bn1_g": 1.0 + nrm((n_out,)),
        "bn1_b": nrm((n_out,)),
        "bn1_m": nrm((n_out,)),
        "bn1_v": 0.5 + jax.random.uniform(next(it), (n_out,), jnp.float32),
        "w2": nrm((3, 3, 3, n_out, n_out)),
        "b2": nrm((n_out,), 0.05),
        "bn2_g": 1.0 + nrm((n_out,)),
        "bn2_b": nrm((n_out,)),
        "bn2_m": nrm((n_out,)),
        "bn2_v": 0.5 + jax.random.uniform(next(it), (n_out,), jnp.float32),
    }
    if stride != 1 or n_in != n_out:
        p.update({
            "wsc": nrm((n_in, n_out)),
            "bsc": nrm((n_out,), 0.05),
            "bnsc_g": 1.0 + nrm((n_out,)),
            "bnsc_b": nrm((n_out,)),
            "bnsc_m": nrm((n_out,)),
            "bnsc_v": 0.5 + jax.random.uniform(next(it), (n_out,), jnp.float32),
        })
    return p


def reference_forward(x, params, stride=1, eps=1e-5):
    """Pure-JAX reference (lax conv) mirroring the PyTorch forward (eval BN)."""
    def conv3x3(z, w_kkkio, b, s):
        w_oidhw = jnp.transpose(w_kkkio, (4, 3, 0, 1, 2))
        y = lax.conv_general_dilated(
            z, w_oidhw, window_strides=(s, s, s), padding=[(1, 1)] * 3,
            dimension_numbers=("NCDHW", "OIDHW", "NCDHW"),
            precision=lax.Precision.HIGHEST)
        return y + b.reshape(1, -1, 1, 1, 1)

    def bn(y, prefix):
        g = params[prefix + "_g"].reshape(1, -1, 1, 1, 1)
        b = params[prefix + "_b"].reshape(1, -1, 1, 1, 1)
        m = params[prefix + "_m"].reshape(1, -1, 1, 1, 1)
        v = params[prefix + "_v"].reshape(1, -1, 1, 1, 1)
        return (y - m) / jnp.sqrt(v + eps) * g + b

    cin = x.shape[1]
    cout = params["w1"].shape[-1]
    out = jax.nn.relu(bn(conv3x3(x, params["w1"], params["b1"], stride), "bn1"))
    out = bn(conv3x3(out, params["w2"], params["b2"], 1), "bn2")
    if stride != 1 or cin != cout:
        w_oidhw = jnp.transpose(
            params["wsc"].reshape(1, 1, 1, cin, cout), (4, 3, 0, 1, 2))
        r = lax.conv_general_dilated(
            x, w_oidhw, window_strides=(stride,) * 3, padding=[(0, 0)] * 3,
            dimension_numbers=("NCDHW", "OIDHW", "NCDHW"),
            precision=lax.Precision.HIGHEST)
        r = bn(r + params["bsc"].reshape(1, -1, 1, 1, 1), "bnsc")
    else:
        r = x
    return jax.nn.relu(out + r)


# ----------------------------------- main ------------------------------------

if __name__ == "__main__":
    key = jax.random.PRNGKey(0)
    k_x, k_p1, k_p2 = jax.random.split(key, 3)

    N, Cin, D, H, W = 2, 4, 8, 8, 8
    Cout = 8
    x = jax.random.normal(k_x, (N, Cin, D, H, W), jnp.float32)

    def check(y, y_ref, name):
        err = float(jnp.max(jnp.abs(y - y_ref)))
        # bf16 MXU operands vs. f32 HIGHEST-precision reference.
        tol = 5e-2 + 2e-2 * float(jnp.max(jnp.abs(y_ref)))
        if err > tol:
            raise AssertionError(f"{name} mismatch: max abs err {err:.3e} > {tol:.3e}")

    # Case 1: n_out != n_in -> projected (1x1x1 conv + BN) shortcut.
    params_proj = make_params(k_p1, Cin, Cout, stride=1)
    y = jax.block_until_ready(post_res_forward(x, params_proj, stride=1))
    assert y.shape == (N, Cout, D, H, W), y.shape
    check(y, reference_forward(x, params_proj, stride=1), "projected-shortcut")

    # Case 2: n_out == n_in, stride == 1 -> identity shortcut.
    params_id = make_params(k_p2, Cin, Cin, stride=1)
    y2 = jax.block_until_ready(post_res_forward(x, params_id, stride=1))
    assert y2.shape == (N, Cin, D, H, W), y2.shape
    check(y2, reference_forward(x, params_id, stride=1), "identity-shortcut")

    print("KERNEL_OK")
</pallas_src>

<mosaic_0001>
module attributes {stable_mosaic.version = 11 : i64} {
  func.func @_conv_tap_kernel(%arg0: i32, %arg1: i32, %arg2: i32, %arg3: memref<1x1x100x4xbf16, #tpu.memory_space<vmem>>, %arg4: memref<27x4x128xbf16, #tpu.memory_space<vmem>>, %arg5: memref<1x128xf32, #tpu.memory_space<vmem>>, %arg6: memref<1x1x8x8x128xbf16, #tpu.memory_space<vmem>>, %arg7: memref<78x128xf32, #tpu.memory_space<vmem>>) attributes {dimension_semantics = [#tpu.dimension_semantics<parallel>, #tpu.dimension_semantics<parallel>, #tpu.dimension_semantics<arbitrary>], iteration_bounds = array<i64: 2, 8, 3>, scalar_prefetch = 0 : i64, scratch_operands = 1 : i64, tpu.core_type = #tpu.core_type<tc>, window_params = [{transform_indices = @transform_0, window_bounds = array<i64: 1, 1, 100, 4>}, {pipeline_mode = #tpu.pipeline_mode<synchronous>, transform_indices = @transform_1, window_bounds = array<i64: 27, 4, 128>}, {pipeline_mode = #tpu.pipeline_mode<synchronous>, transform_indices = @transform_2, window_bounds = array<i64: 1, 128>}, {transform_indices = @transform_3, window_bounds = array<i64: 1, 1, 8, 8, 128>}]} {
    %c0_i32 = arith.constant 0 : i32
    %0 = arith.cmpi eq, %arg2, %c0_i32 : i32
    %1 = arith.extui %0 : i1 to i32
    %c0_i32_0 = arith.constant 0 : i32
    %2 = arith.cmpi ne, %1, %c0_i32_0 : i32
    scf.if %2 {
      %cst_69 = arith.constant 0.000000e+00 : f32
      %89 = vector.broadcast %cst_69 : f32 to vector<78x128xf32>
      %c0_70 = arith.constant 0 : index
      %c0_71 = arith.constant 0 : index
      %90 = vector.load %arg7[%c0_70, %c0_71] : memref<78x128xf32, #tpu.memory_space<vmem>>, vector<78x128xf32>
      tpu.vector_store %arg7[%c0_70, %c0_71], %89 {strides = array<i32>} : memref<78x128xf32, #tpu.memory_space<vmem>>, vector<78x128xf32>,
    } else {
    }
    %c0 = arith.constant 0 : index
    %c0_1 = arith.constant 0 : index
    %3 = vector.load %arg7[%c0, %c0_1] : memref<78x128xf32, #tpu.memory_space<vmem>>, vector<78x128xf32>
    %c0_2 = arith.constant 0 : index
    %c0_3 = arith.constant 0 : index
    %c0_4 = arith.constant 0 : index
    %c0_5 = arith.constant 0 : index
    %4 = vector.load %arg3[%c0_2, %c0_3, %c0_4, %c0_5] : memref<1x1x100x4xbf16, #tpu.memory_space<vmem>>, vector<1x1x78x4xbf16>
    %5 = vector.shape_cast %4 : vector<1x1x78x4xbf16> to vector<78x4xbf16>
    %c9_i32 = arith.constant 9 : i32
    %6 = arith.muli %arg2, %c9_i32 : i32
    %c0_i32_6 = arith.constant 0 : i32
    %7 = arith.addi %6, %c0_i32_6 : i32
    %8 = arith.index_cast %7 : i32 to index
    %c0_7 = arith.constant 0 : index
    %c0_8 = arith.constant 0 : index
    %9 = vector.load %arg4[%8, %c0_7, %c0_8] : memref<27x4x128xbf16, #tpu.memory_space<vmem>>, vector<1x4x128xbf16>
    %10 = vector.shape_cast %9 : vector<1x4x128xbf16> to vector<4x128xbf16>
    %cst = arith.constant dense<0.000000e+00> : vector<78x128xf32>
    %11 = tpu.matmul %5, %10, %cst {dimension_numbers = #tpu.dot_dimension_numbers<[1], [0], [0], [1], [0, 0, 1, 1], [], []>} : vector<78x4xbf16>, vector<4x128xbf16>, vector<78x128xf32> -> vector<78x128xf32>
    %12 = arith.addf %3, %11 : vector<78x128xf32>
    %c0_9 = arith.constant 0 : index
    %c0_10 = arith.constant 0 : index
    %c1 = arith.constant 1 : index
    %c0_11 = arith.constant 0 : index
    %13 = vector.load %arg3[%c0_9, %c0_10, %c1, %c0_11] : memref<1x1x100x4xbf16, #tpu.memory_space<vmem>>, vector<1x1x78x4xbf16>
    %14 = vector.shape_cast %13 : vector<1x1x78x4xbf16> to vector<78x4xbf16>
    %c9_i32_12 = arith.constant 9 : i32
    %15 = arith.muli %arg2, %c9_i32_12 : i32
    %c1_i32 = arith.constant 1 : i32
    %16 = arith.addi %15, %c1_i32 : i32
    %17 = arith.index_cast %16 : i32 to index
    %c0_13 = arith.constant 0 : index
    %c0_14 = arith.constant 0 : index
    %18 = vector.load %arg4[%17, %c0_13, %c0_14] : memref<27x4x128xbf16, #tpu.memory_space<vmem>>, vector<1x4x128xbf16>
    %19 = vector.shape_cast %18 : vector<1x4x128xbf16> to vector<4x128xbf16>
    %cst_15 = arith.constant dense<0.000000e+00> : vector<78x128xf32>
    %20 = tpu.matmul %14, %19, %cst_15 {dimension_numbers = #tpu.dot_dimension_numbers<[1], [0], [0], [1], [0, 0, 1, 1], [], []>} : vector<78x4xbf16>, vector<4x128xbf16>, vector<78x128xf32> -> vector<78x128xf32>
    %21 = arith.addf %12, %20 : vector<78x128xf32>
    %c0_16 = arith.constant 0 : index
    %c0_17 = arith.constant 0 : index
    %c2 = arith.constant 2 : index
    %c0_18 = arith.constant 0 : index
    %22 = vector.load %arg3[%c0_16, %c0_17, %c2, %c0_18] : memref<1x1x100x4xbf16, #tpu.memory_space<vmem>>, vector<1x1x78x4xbf16>
    %23 = vector.shape_cast %22 : vector<1x1x78x4xbf16> to vector<78x4xbf16>
    %c9_i32_19 = arith.constant 9 : i32
    %24 = arith.muli %arg2, %c9_i32_19 : i32
    %c2_i32 = arith.constant 2 : i32
    %25 = arith.addi %24, %c2_i32 : i32
    %26 = arith.index_cast %25 : i32 to index
    %c0_20 = arith.constant 0 : index
    %c0_21 = arith.constant 0 : index
    %27 = vector.load %arg4[%26, %c0_20, %c0_21] : memref<27x4x128xbf16, #tpu.memory_space<vmem>>, vector<1x4x128xbf16>
    %28 = vector.shape_cast %27 : vector<1x4x128xbf16> to vector<4x128xbf16>
    %cst_22 = arith.constant dense<0.000000e+00> : vector<78x128xf32>
    %29 = tpu.matmul %23, %28, %cst_22 {dimension_numbers = #tpu.dot_dimension_numbers<[1], [0], [0], [1], [0, 0, 1, 1], [], []>} : vector<78x4xbf16>, vector<4x128xbf16>, vector<78x128xf32> -> vector<78x128xf32>
    %30 = arith.addf %21, %29 : vector<78x128xf32>
    %c0_23 = arith.constant 0 : index
    %c0_24 = arith.constant 0 : index
    %c10 = arith.constant 10 : index
    %c0_25 = arith.constant 0 : index
    %31 = vector.load %arg3[%c0_23, %c0_24, %c10, %c0_25] : memref<1x1x100x4xbf16, #tpu.memory_space<vmem>>, vector<1x1x78x4xbf16>
    %32 = vector.shape_cast %31 : vector<1x1x78x4xbf16> to vector<78x4xbf16>
    %c9_i32_26 = arith.constant 9 : i32
    %33 = arith.muli %arg2, %c9_i32_26 : i32
    %c3_i32 = arith.constant 3 : i32
    %34 = arith.addi %33, %c3_i32 : i32
    %35 = arith.index_cast %34 : i32 to index
    %c0_27 = arith.constant 0 : index
    %c0_28 = arith.constant 0 : index
    %36 = vector.load %arg4[%35, %c0_27, %c0_28] : memref<27x4x128xbf16, #tpu.memory_space<vmem>>, vector<1x4x128xbf16>
    %37 = vector.shape_cast %36 : vector<1x4x128xbf16> to vector<4x128xbf16>
    %cst_29 = arith.constant dense<0.000000e+00> : vector<78x128xf32>
    %38 = tpu.matmul %32, %37, %cst_29 {dimension_numbers = #tpu.dot_dimension_numbers<[1], [0], [0], [1], [0, 0, 1, 1], [], []>} : vector<78x4xbf16>, vector<4x128xbf16>, vector<78x128xf32> -> vector<78x128xf32>
    %39 = arith.addf %30, %38 : vector<78x128xf32>
    %c0_30 = arith.constant 0 : index
    %c0_31 = arith.constant 0 : index
    %c11 = arith.constant 11 : index
    %c0_32 = arith.constant 0 : index
    %40 = vector.load %arg3[%c0_30, %c0_31, %c11, %c0_32] : memref<1x1x100x4xbf16, #tpu.memory_space<vmem>>, vector<1x1x78x4xbf16>
    %41 = vector.shape_cast %40 : vector<1x1x78x4xbf16> to vector<78x4xbf16>
    %c9_i32_33 = arith.constant 9 : i32
    %42 = arith.muli %arg2, %c9_i32_33 : i32
    %c4_i32 = arith.constant 4 : i32
    %43 = arith.addi %42, %c4_i32 : i32
    %44 = arith.index_cast %43 : i32 to index
    %c0_34 = arith.constant 0 : index
    %c0_35 = arith.constant 0 : index
    %45 = vector.load %arg4[%44, %c0_34, %c0_35] : memref<27x4x128xbf16, #tpu.memory_space<vmem>>, vector<1x4x128xbf16>
    %46 = vector.shape_cast %45 : vector<1x4x128xbf16> to vector<4x128xbf16>
    %cst_36 = arith.constant dense<0.000000e+00> : vector<78x128xf32>
    %47 = tpu.matmul %41, %46, %cst_36 {dimension_numbers = #tpu.dot_dimension_numbers<[1], [0], [0], [1], [0, 0, 1, 1], [], []>} : vector<78x4xbf16>, vector<4x128xbf16>, vector<78x128xf32> -> vector<78x128xf32>
    %48 = arith.addf %39, %47 : vector<78x128xf32>
    %c0_37 = arith.constant 0 : index
    %c0_38 = arith.constant 0 : index
    %c12 = arith.constant 12 : index
    %c0_39 = arith.constant 0 : index
    %49 = vector.load %arg3[%c0_37, %c0_38, %c12, %c0_39] : memref<1x1x100x4xbf16, #tpu.memory_space<vmem>>, vector<1x1x78x4xbf16>
    %50 = vector.shape_cast %49 : vector<1x1x78x4xbf16> to vector<78x4xbf16>
    %c9_i32_40 = arith.constant 9 : i32
    %51 = arith.muli %arg2, %c9_i32_40 : i32
    %c5_i32 = arith.constant 5 : i32
    %52 = arith.addi %51, %c5_i32 : i32
    %53 = arith.index_cast %52 : i32 to index
    %c0_41 = arith.constant 0 : index
    %c0_42 = arith.constant 0 : index
    %54 = vector.load %arg4[%53, %c0_41, %c0_42] : memref<27x4x128xbf16, #tpu.memory_space<vmem>>, vector<1x4x128xbf16>
    %55 = vector.shape_cast %54 : vector<1x4x128xbf16> to vector<4x128xbf16>
    %cst_43 = arith.constant dense<0.000000e+00> : vector<78x128xf32>
    %56 = tpu.matmul %50, %55, %cst_43 {dimension_numbers = #tpu.dot_dimension_numbers<[1], [0], [0], [1], [0, 0, 1, 1], [], []>} : vector<78x4xbf16>, vector<4x128xbf16>, vector<78x128xf32> -> vector<78x128xf32>
    %57 = arith.addf %48, %56 : vector<78x128xf32>
    %c0_44 = arith.constant 0 : index
    %c0_45 = arith.constant 0 : index
    %c20 = arith.constant 20 : index
    %c0_46 = arith.constant 0 : index
    %58 = vector.load %arg3[%c0_44, %c0_45, %c20, %c0_46] : memref<1x1x100x4xbf16, #tpu.memory_space<vmem>>, vector<1x1x78x4xbf16>
    %59 = vector.shape_cast %58 : vector<1x1x78x4xbf16> to vector<78x4xbf16>
    %c9_i32_47 = arith.constant 9 : i32
    %60 = arith.muli %arg2, %c9_i32_47 : i32
    %c6_i32 = arith.constant 6 : i32
    %61 = arith.addi %60, %c6_i32 : i32
    %62 = arith.index_cast %61 : i32 to index
    %c0_48 = arith.constant 0 : index
    %c0_49 = arith.constant 0 : index
    %63 = vector.load %arg4[%62, %c0_48, %c0_49] : memref<27x4x128xbf16, #tpu.memory_space<vmem>>, vector<1x4x128xbf16>
    %64 = vector.shape_cast %63 : vector<1x4x128xbf16> to vector<4x128xbf16>
    %cst_50 = arith.constant dense<0.000000e+00> : vector<78x128xf32>
    %65 = tpu.matmul %59, %64, %cst_50 {dimension_numbers = #tpu.dot_dimension_numbers<[1], [0], [0], [1], [0, 0, 1, 1], [], []>} : vector<78x4xbf16>, vector<4x128xbf16>, vector<78x128xf32> -> vector<78x128xf32>
    %66 = arith.addf %57, %65 : vector<78x128xf32>
    %c0_51 = arith.constant 0 : index
    %c0_52 = arith.constant 0 : index
    %c21 = arith.constant 21 : index
    %c0_53 = arith.constant 0 : index
    %67 = vector.load %arg3[%c0_51, %c0_52, %c21, %c0_53] : memref<1x1x100x4xbf16, #tpu.memory_space<vmem>>, vector<1x1x78x4xbf16>
    %68 = vector.shape_cast %67 : vector<1x1x78x4xbf16> to vector<78x4xbf16>
    %c9_i32_54 = arith.constant 9 : i32
    %69 = arith.muli %arg2, %c9_i32_54 : i32
    %c7_i32 = arith.constant 7 : i32
    %70 = arith.addi %69, %c7_i32 : i32
    %71 = arith.index_cast %70 : i32 to index
    %c0_55 = arith.constant 0 : index
    %c0_56 = arith.constant 0 : index
    %72 = vector.load %arg4[%71, %c0_55, %c0_56] : memref<27x4x128xbf16, #tpu.memory_space<vmem>>, vector<1x4x128xbf16>
    %73 = vector.shape_cast %72 : vector<1x4x128xbf16> to vector<4x128xbf16>
    %cst_57 = arith.constant dense<0.000000e+00> : vector<78x128xf32>
    %74 = tpu.matmul %68, %73, %cst_57 {dimension_numbers = #tpu.dot_dimension_numbers<[1], [0], [0], [1], [0, 0, 1, 1], [], []>} : vector<78x4xbf16>, vector<4x128xbf16>, vector<78x128xf32> -> vector<78x128xf32>
    %75 = arith.addf %66, %74 : vector<78x128xf32>
    %c0_58 = arith.constant 0 : index
    %c0_59 = arith.constant 0 : index
    %c22 = arith.constant 22 : index
    %c0_60 = arith.constant 0 : index
    %76 = vector.load %arg3[%c0_58, %c0_59, %c22, %c0_60] : memref<1x1x100x4xbf16, #tpu.memory_space<vmem>>, vector<1x1x78x4xbf16>
    %77 = vector.shape_cast %76 : vector<1x1x78x4xbf16> to vector<78x4xbf16>
    %c9_i32_61 = arith.constant 9 : i32
    %78 = arith.muli %arg2, %c9_i32_61 : i32
    %c8_i32 = arith.constant 8 : i32
    %79 = arith.addi %78, %c8_i32 : i32
    %80 = arith.index_cast %79 : i32 to index
    %c0_62 = arith.constant 0 : index
    %c0_63 = arith.constant 0 : index
    %81 = vector.load %arg4[%80, %c0_62, %c0_63] : memref<27x4x128xbf16, #tpu.memory_space<vmem>>, vector<1x4x128xbf16>
    %82 = vector.shape_cast %81 : vector<1x4x128xbf16> to vector<4x128xbf16>
    %cst_64 = arith.constant dense<0.000000e+00> : vector<78x128xf32>
    %83 = tpu.matmul %77, %82, %cst_64 {dimension_numbers = #tpu.dot_dimension_numbers<[1], [0], [0], [1], [0, 0, 1, 1], [], []>} : vector<78x4xbf16>, vector<4x128xbf16>, vector<78x128xf32> -> vector<78x128xf32>
    %84 = arith.addf %75, %83 : vector<78x128xf32>
    %c0_65 = arith.constant 0 : index
    %c0_66 = arith.constant 0 : index
    %85 = vector.load %arg7[%c0_65, %c0_66] : memref<78x128xf32, #tpu.memory_space<vmem>>, vector<78x128xf32>
    tpu.vector_store %arg7[%c0_65, %c0_66], %84 {strides = array<i32>} : memref<78x128xf32, #tpu.memory_space<vmem>>, vector<78x128xf32>,
    %c2_i32_67 = arith.constant 2 : i32
    %86 = arith.cmpi eq, %arg2, %c2_i32_67 : i32
    %87 = arith.extui %86 : i1 to i32
    %c0_i32_68 = arith.constant 0 : i32
    %88 = arith.cmpi ne, %87, %c0_i32_68 : i32
    scf.if %88 {
      %c0_69 = arith.constant 0 : index
      %c0_70 = arith.constant 0 : index
      %89 = vector.load %arg7[%c0_69, %c0_70] : memref<78x128xf32, #tpu.memory_space<vmem>>, vector<8x128xf32>
      %c0_71 = arith.constant 0 : index
      %c0_72 = arith.constant 0 : index
      %90 = vector.load %arg5[%c0_71, %c0_72] : memref<1x128xf32, #tpu.memory_space<vmem>>, vector<1x128xf32>
      %91 = vector.broadcast %90 : vector<1x128xf32> to vector<8x128xf32>
      %92 = arith.addf %89, %91 : vector<8x128xf32>
      %cst_73 = arith.constant 0.000000e+00 : f32
      %93 = vector.broadcast %cst_73 : f32 to vector<8x128xf32>
      %94 = arith.maximumf %92, %93 : vector<8x128xf32>
      %95 = arith.truncf %94 : vector<8x128xf32> to vector<8x128xbf16>
      %c0_74 = arith.constant 0 : index
      %c0_75 = arith.constant 0 : index
      %c0_76 = arith.constant 0 : index
      %c0_77 = arith.constant 0 : index
      %c0_78 = arith.constant 0 : index
      %96 = vector.load %arg6[%c0_74, %c0_75, %c0_76, %c0_77, %c0_78] : memref<1x1x8x8x128xbf16, #tpu.memory_space<vmem>>, vector<1x1x1x8x128xbf16>
      %97 = vector.shape_cast %96 : vector<1x1x1x8x128xbf16> to vector<8x128xbf16>
      %98 = vector.shape_cast %95 : vector<8x128xbf16> to vector<1x1x1x8x128xbf16>
      tpu.vector_store %arg6[%c0_74, %c0_75, %c0_76, %c0_77, %c0_78], %98 {strides = array<i32>} : memref<1x1x8x8x128xbf16, #tpu.memory_space<vmem>>, vector<1x1x1x8x128xbf16>,
      %c10_79 = arith.constant 10 : index
      %c0_80 = arith.constant 0 : index
      %99 = vector.load %arg7[%c10_79, %c0_80] : memref<78x128xf32, #tpu.memory_space<vmem>>, vector<8x128xf32>
      %c0_81 = arith.constant 0 : index
      %c0_82 = arith.constant 0 : index
      %100 = vector.load %arg5[%c0_81, %c0_82] : memref<1x128xf32, #tpu.memory_space<vmem>>, vector<1x128xf32>
      %101 = vector.broadcast %100 : vector<1x128xf32> to vector<8x128xf32>
      %102 = arith.addf %99, %101 : vector<8x128xf32>
      %cst_83 = arith.constant 0.000000e+00 : f32
      %103 = vector.broadcast %cst_83 : f32 to vector<8x128xf32>
      %104 = arith.maximumf %102, %103 : vector<8x128xf32>
      %105 = arith.truncf %104 : vector<8x128xf32> to vector<8x128xbf16>
      %c0_84 = arith.constant 0 : index
      %c0_85 = arith.constant 0 : index
      %c1_86 = arith.constant 1 : index
      %c0_87 = arith.constant 0 : index
      %c0_88 = arith.constant 0 : index
      %106 = vector.load %arg6[%c0_84, %c0_85, %c1_86, %c0_87, %c0_88] : memref<1x1x8x8x128xbf16, #tpu.memory_space<vmem>>, vector<1x1x1x8x128xbf16>
      %107 = vector.shape_cast %106 : vector<1x1x1x8x128xbf16> to vector<8x128xbf16>
      %108 = vector.shape_cast %105 : vector<8x128xbf16> to vector<1x1x1x8x128xbf16>
      tpu.vector_store %arg6[%c0_84, %c0_85, %c1_86, %c0_87, %c0_88], %108 {strides = array<i32>} : memref<1x1x8x8x128xbf16, #tpu.memory_space<vmem>>, vector<1x1x1x8x128xbf16>,
      %c20_89 = arith.constant 20 : index
      %c0_90 = arith.constant 0 : index
      %109 = vector.load %arg7[%c20_89, %c0_90] : memref<78x128xf32, #tpu.memory_space<vmem>>, vector<8x128xf32>
      %c0_91 = arith.constant 0 : index
      %c0_92 = arith.constant 0 : index
      %110 = vector.load %arg5[%c0_91, %c0_92] : memref<1x128xf32, #tpu.memory_space<vmem>>, vector<1x128xf32>
      %111 = vector.broadcast %110 : vector<1x128xf32> to vector<8x128xf32>
      %112 = arith.addf %109, %111 : vector<8x128xf32>
      %cst_93 = arith.constant 0.000000e+00 : f32
      %113 = vector.broadcast %cst_93 : f32 to vector<8x128xf32>
      %114 = arith.maximumf %112, %113 : vector<8x128xf32>
      %115 = arith.truncf %114 : vector<8x128xf32> to vector<8x128xbf16>
      %c0_94 = arith.constant 0 : index
      %c0_95 = arith.constant 0 : index
      %c2_96 = arith.constant 2 : index
      %c0_97 = arith.constant 0 : index
      %c0_98 = arith.constant 0 : index
      %116 = vector.load %arg6[%c0_94, %c0_95, %c2_96, %c0_97, %c0_98] : memref<1x1x8x8x128xbf16, #tpu.memory_space<vmem>>, vector<1x1x1x8x128xbf16>
      %117 = vector.shape_cast %116 : vector<1x1x1x8x128xbf16> to vector<8x128xbf16>
      %118 = vector.shape_cast %115 : vector<8x128xbf16> to vector<1x1x1x8x128xbf16>
      tpu.vector_store %arg6[%c0_94, %c0_95, %c2_96, %c0_97, %c0_98], %118 {strides = array<i32>} : memref<1x1x8x8x128xbf16, #tpu.memory_space<vmem>>, vector<1x1x1x8x128xbf16>,
      %c30 = arith.constant 30 : index
      %c0_99 = arith.constant 0 : index
      %119 = vector.load %arg7[%c30, %c0_99] : memref<78x128xf32, #tpu.memory_space<vmem>>, vector<8x128xf32>
      %c0_100 = arith.constant 0 : index
      %c0_101 = arith.constant 0 : index
      %120 = vector.load %arg5[%c0_100, %c0_101] : memref<1x128xf32, #tpu.memory_space<vmem>>, vector<1x128xf32>
      %121 = vector.broadcast %120 : vector<1x128xf32> to vector<8x128xf32>
      %122 = arith.addf %119, %121 : vector<8x128xf32>
      %cst_102 = arith.constant 0.000000e+00 : f32
      %123 = vector.broadcast %cst_102 : f32 to vector<8x128xf32>
      %124 = arith.maximumf %122, %123 : vector<8x128xf32>
      %125 = arith.truncf %124 : vector<8x128xf32> to vector<8x128xbf16>
      %c0_103 = arith.constant 0 : index
      %c0_104 = arith.constant 0 : index
      %c3 = arith.constant 3 : index
      %c0_105 = arith.constant 0 : index
      %c0_106 = arith.constant 0 : index
      %126 = vector.load %arg6[%c0_103, %c0_104, %c3, %c0_105, %c0_106] : memref<1x1x8x8x128xbf16, #tpu.memory_space<vmem>>, vector<1x1x1x8x128xbf16>
      %127 = vector.shape_cast %126 : vector<1x1x1x8x128xbf16> to vector<8x128xbf16>
      %128 = vector.shape_cast %125 : vector<8x128xbf16> to vector<1x1x1x8x128xbf16>
      tpu.vector_store %arg6[%c0_103, %c0_104, %c3, %c0_105, %c0_106], %128 {strides = array<i32>} : memref<1x1x8x8x128xbf16, #tpu.memory_space<vmem>>, vector<1x1x1x8x128xbf16>,
      %c40 = arith.constant 40 : index
      %c0_107 = arith.constant 0 : index
      %129 = vector.load %arg7[%c40, %c0_107] : memref<78x128xf32, #tpu.memory_space<vmem>>, vector<8x128xf32>
      %c0_108 = arith.constant 0 : index
      %c0_109 = arith.constant 0 : index
      %130 = vector.load %arg5[%c0_108, %c0_109] : memref<1x128xf32, #tpu.memory_space<vmem>>, vector<1x128xf32>
      %131 = vector.broadcast %130 : vector<1x128xf32> to vector<8x128xf32>
      %132 = arith.addf %129, %131 : vector<8x128xf32>
      %cst_110 = arith.constant 0.000000e+00 : f32
      %133 = vector.broadcast %cst_110 : f32 to vector<8x128xf32>
      %134 = arith.maximumf %132, %133 : vector<8x128xf32>
      %135 = arith.truncf %134 : vector<8x128xf32> to vector<8x128xbf16>
      %c0_111 = arith.constant 0 : index
      %c0_112 = arith.constant 0 : index
      %c4 = arith.constant 4 : index
      %c0_113 = arith.constant 0 : index
      %c0_114 = arith.constant 0 : index
      %136 = vector.load %arg6[%c0_111, %c0_112, %c4, %c0_113, %c0_114] : memref<1x1x8x8x128xbf16, #tpu.memory_space<vmem>>, vector<1x1x1x8x128xbf16>
      %137 = vector.shape_cast %136 : vector<1x1x1x8x128xbf16> to vector<8x128xbf16>
      %138 = vector.shape_cast %135 : vector<8x128xbf16> to vector<1x1x1x8x128xbf16>
      tpu.vector_store %arg6[%c0_111, %c0_112, %c4, %c0_113, %c0_114], %138 {strides = array<i32>} : memref<1x1x8x8x128xbf16, #tpu.memory_space<vmem>>, vector<1x1x1x8x128xbf16>,
      %c50 = arith.constant 50 : index
      %c0_115 = arith.constant 0 : index
      %139 = vector.load %arg7[%c50, %c0_115] : memref<78x128xf32, #tpu.memory_space<vmem>>, vector<8x128xf32>
      %c0_116 = arith.constant 0 : index
      %c0_117 = arith.constant 0 : index
      %140 = vector.load %arg5[%c0_116, %c0_117] : memref<1x128xf32, #tpu.memory_space<vmem>>, vector<1x128xf32>
      %141 = vector.broadcast %140 : vector<1x128xf32> to vector<8x128xf32>
      %142 = arith.addf %139, %141 : vector<8x128xf32>
      %cst_118 = arith.constant 0.000000e+00 : f32
      %143 = vector.broadcast %cst_118 : f32 to vector<8x128xf32>
      %144 = arith.maximumf %142, %143 : vector<8x128xf32>
      %145 = arith.truncf %144 : vector<8x128xf32> to vector<8x128xbf16>
      %c0_119 = arith.constant 0 : index
      %c0_120 = arith.constant 0 : index
      %c5 = arith.constant 5 : index
      %c0_121 = arith.constant 0 : index
      %c0_122 = arith.constant 0 : index
      %146 = vector.load %arg6[%c0_119, %c0_120, %c5, %c0_121, %c0_122] : memref<1x1x8x8x128xbf16, #tpu.memory_space<vmem>>, vector<1x1x1x8x128xbf16>
      %147 = vector.shape_cast %146 : vector<1x1x1x8x128xbf16> to vector<8x128xbf16>
      %148 = vector.shape_cast %145 : vector<8x128xbf16> to vector<1x1x1x8x128xbf16>
      tpu.vector_store %arg6[%c0_119, %c0_120, %c5, %c0_121, %c0_122], %148 {strides = array<i32>} : memref<1x1x8x8x128xbf16, #tpu.memory_space<vmem>>, vector<1x1x1x8x128xbf16>,
      %c60 = arith.constant 60 : index
      %c0_123 = arith.constant 0 : index
      %149 = vector.load %arg7[%c60, %c0_123] : memref<78x128xf32, #tpu.memory_space<vmem>>, vector<8x128xf32>
      %c0_124 = arith.constant 0 : index
      %c0_125 = arith.constant 0 : index
      %150 = vector.load %arg5[%c0_124, %c0_125] : memref<1x128xf32, #tpu.memory_space<vmem>>, vector<1x128xf32>
      %151 = vector.broadcast %150 : vector<1x128xf32> to vector<8x128xf32>
      %152 = arith.addf %149, %151 : vector<8x128xf32>
      %cst_126 = arith.constant 0.000000e+00 : f32
      %153 = vector.broadcast %cst_126 : f32 to vector<8x128xf32>
      %154 = arith.maximumf %152, %153 : vector<8x128xf32>
      %155 = arith.truncf %154 : vector<8x128xf32> to vector<8x128xbf16>
      %c0_127 = arith.constant 0 : index
      %c0_128 = arith.constant 0 : index
      %c6 = arith.constant 6 : index
      %c0_129 = arith.constant 0 : index
      %c0_130 = arith.constant 0 : index
      %156 = vector.load %arg6[%c0_127, %c0_128, %c6, %c0_129, %c0_130] : memref<1x1x8x8x128xbf16, #tpu.memory_space<vmem>>, vector<1x1x1x8x128xbf16>
      %157 = vector.shape_cast %156 : vector<1x1x1x8x128xbf16> to vector<8x128xbf16>
      %158 = vector.shape_cast %155 : vector<8x128xbf16> to vector<1x1x1x8x128xbf16>
      tpu.vector_store %arg6[%c0_127, %c0_128, %c6, %c0_129, %c0_130], %158 {strides = array<i32>} : memref<1x1x8x8x128xbf16, #tpu.memory_space<vmem>>, vector<1x1x1x8x128xbf16>,
      %c70 = arith.constant 70 : index
      %c0_131 = arith.constant 0 : index
      %159 = vector.load %arg7[%c70, %c0_131] : memref<78x128xf32, #tpu.memory_space<vmem>>, vector<8x128xf32>
      %c0_132 = arith.constant 0 : index
      %c0_133 = arith.constant 0 : index
      %160 = vector.load %arg5[%c0_132, %c0_133] : memref<1x128xf32, #tpu.memory_space<vmem>>, vector<1x128xf32>
      %161 = vector.broadcast %160 : vector<1x128xf32> to vector<8x128xf32>
      %162 = arith.addf %159, %161 : vector<8x128xf32>
      %cst_134 = arith.constant 0.000000e+00 : f32
      %163 = vector.broadcast %cst_134 : f32 to vector<8x128xf32>
      %164 = arith.maximumf %162, %163 : vector<8x128xf32>
      %165 = arith.truncf %164 : vector<8x128xf32> to vector<8x128xbf16>
      %c0_135 = arith.constant 0 : index
      %c0_136 = arith.constant 0 : index
      %c7 = arith.constant 7 : index
      %c0_137 = arith.constant 0 : index
      %c0_138 = arith.constant 0 : index
      %166 = vector.load %arg6[%c0_135, %c0_136, %c7, %c0_137, %c0_138] : memref<1x1x8x8x128xbf16, #tpu.memory_space<vmem>>, vector<1x1x1x8x128xbf16>
      %167 = vector.shape_cast %166 : vector<1x1x1x8x128xbf16> to vector<8x128xbf16>
      %168 = vector.shape_cast %165 : vector<8x128xbf16> to vector<1x1x1x8x128xbf16>
      tpu.vector_store %arg6[%c0_135, %c0_136, %c7, %c0_137, %c0_138], %168 {strides = array<i32>} : memref<1x1x8x8x128xbf16, #tpu.memory_space<vmem>>, vector<1x1x1x8x128xbf16>,
    } else {
    }
    return
  }
  func.func @transform_0(%arg0: i32, %arg1: i32, %arg2: i32) -> (i32, i32, i32, i32) {
    %c1_i32 = arith.constant 1 : i32
    %0 = arith.muli %arg1, %c1_i32 : i32
    %1 = arith.addi %0, %arg2 : i32
    %c0_i32 = arith.constant 0 : i32
    %c0_i32_0 = arith.constant 0 : i32
    %c0_i32_1 = arith.constant 0 : i32
    return %arg0, %1, %c0_i32, %c0_i32_0 : i32, i32, i32, i32
  }
  func.func @transform_1(%arg0: i32, %arg1: i32, %arg2: i32) -> (i32, i32, i32) {
    %c0_i32 = arith.constant 0 : i32
    %c0_i32_0 = arith.constant 0 : i32
    %c0_i32_1 = arith.constant 0 : i32
    %c0_i32_2 = arith.constant 0 : i32
    return %c0_i32, %c0_i32_0, %c0_i32_1 : i32, i32, i32
  }
  func.func @transform_2(%arg0: i32, %arg1: i32, %arg2: i32) -> (i32, i32) {
    %c0_i32 = arith.constant 0 : i32
    %c0_i32_0 = arith.constant 0 : i32
    %c0_i32_1 = arith.constant 0 : i32
    return %c0_i32, %c0_i32_0 : i32, i32
  }
  func.func @transform_3(%arg0: i32, %arg1: i32, %arg2: i32) -> (i32, i32, i32, i32, i32) {
    %c0_i32 = arith.constant 0 : i32
    %c0_i32_0 = arith.constant 0 : i32
    %c0_i32_1 = arith.constant 0 : i32
    %c0_i32_2 = arith.constant 0 : i32
    return %arg0, %arg1, %c0_i32, %c0_i32_0, %c0_i32_1 : i32, i32, i32, i32, i32
  }
}

</mosaic_0001>

<llo_original>
// kernel: tpu_custom_call.1
$region0: #{tpu_custom_call.1}
  #allocation0 [shape = 'u32[]', space=smem, size = 0x4, offset = 0x4, fixed_abs, tag = 'smem constant byte address 0x4 - core index']
  #allocation1 [shape = 'u32[144,128]{1,0:T(1,128)}', space=vmem, size = 0x12000, scoped, tag = 'internal scratch']
  #allocation2 [shape = 'f32[78,128]{1,0:T(8,128)}', space=vmem, size = 0xa000, scoped, tag = 'scratch operand']
  %s0 = inlined_call_operand.vmem [shape: bf16[2,10,100,4], index: 0, kind: input, shape index: {}]
  %s1 = inlined_call_operand.vmem [shape: bf16[27,4,128], index: 1, kind: input, shape index: {}]
  %s2 = inlined_call_operand.vmem [shape: f32[1,128], index: 2, kind: input, shape index: {}]
  %s3 = inlined_call_operand.hbm [shape: bf16[2,8,8,8,128], index: 3, kind: output, shape index: {}]
  %s4 = sld [smem:[#allocation0]]
  $region53: #{tpu_custom_call.1} parent=0
    _
  %s6 = ssub.s32 1, %s4
  %s7 = scalar_select 0, %s6, %s4
  $region1: #{tpu_custom_call.1} parent=0
    #allocation3 [shape = 'u8[32768]{0}', space=vmem, size = 0x8000, scoped, tag = 'output window, operand 0']
    #allocation4 [shape = 's32[2]{0}', space=sflag, size = 0x8, scoped, tag = 'scoped memory for tpu_custom_call.1']
    %8 = vsyncpa [#allocation4], 0
    %s9 = scalar_lea.sflag [#allocation4], 1
    %10 = vsyncpa %s9, 0
    loop: start=0, step=1, limit=50
    $region2: #{tpu_custom_call.1} parent=1 // loop_pre_header
      _
    $region3: #{tpu_custom_call.1} parent=1 // loop_header
      %s12 = sphi 0, %s16
      %p13 = scmp.ge.s32.totalorder %s12, 50
      %s19 = sphi 0, %s38
      %s20 = sphi 0, %s34
      %s21 = sphi 0, %s30
      %s22 = sphi 0, %s19
      %s23 = sphi 0, %s20
      %s24 = sphi 0, %s21
      %s25 = sphi 0, %s22
      %s26 = sphi 0, %s23
      %s27 = sphi 0, %s24
      %s45 = sphi 0, %s47
      %s48 = sphi 0, %s45
      %s49 = sphi 0, %s48
      %s65 = sphi 0, %s49
      %s69 = sphi 0, %s69
      %s71 = sphi 0, %s69
      %s72 = sphi 0, %s71
      %s86 = sphi 0, %s72
      %s90 = sphi 0, %s90
      %s92 = sphi 0, %s90
      %s93 = sphi 0, %s92
      %s107 = sphi 0, %s93
      %s115 = sphi 0, %s117
      %s118 = sphi 0, %s115
      %s119 = sphi 0, %s118
      %s135 = sphi 0, %s119
    $region4: #{tpu_custom_call.1} parent=1 // loop_header_branch
      %15 = sbr.rel (%p13) target = $region8
    $region5: #{tpu_custom_call.1} parent=1 // loop_body
      %s17 = ssub.s32 %s12, 1
      %s18 = ssub.s32 %s12, 2
      %s28 = sadd.s32 1, %s21
      %p29 = scmp.ge.s32.totalorder %s28, 3
      %s30 = scalar_select %p29, 0, %s28
      %s31 = sadd.s32 1, %s20
      %s32 = scalar_select %p29, %s31, %s20
      %p33 = scmp.ge.s32.totalorder %s32, 8
      %s34 = scalar_select %p33, 0, %s32
      %s35 = sadd.s32 1, %s19
      %s36 = scalar_select %p33, %s35, %s19
      %p37 = scmp.ge.s32.totalorder %s36, 2
      %s38 = scalar_select %p37, 0, %s36
      %s39 = sadd.s32 %s20, %s21
      %s40 = sadd.s32 %s34, %s30
      %s41 = ssub.s32 %s19, %s38
      %s42 = ssub.s32 %s39, %s40
      %s43 = sor.u32 %s41, %s42
      %p44 = scmp.eq.s32.totalorder %s43, 0
      %s46 = sadd.s32 %s45, 1
      %s47 = scalar_select %p44, %s45, %s46
      %p50 = pneg %p44
      %p51 = scmp.eq.s32.totalorder %s12, 47
      %p52 = por %p50, %p51
      %p53 = scmp.ne.s32.totalorder %s45, %s48
      %p54 = scmp.eq.s32.totalorder %s12, 0
      %p55 = por %p53, %p54
      %p56 = scmp.ne.s32.totalorder %s45, %s48
      %p57 = scmp.eq.s32.totalorder %s17, 47
      %p58 = por %p56, %p57
      %p59 = scmp.ne.s32.totalorder %s48, %s49
      %p60 = scmp.eq.s32.totalorder %s17, 0
      %p61 = por %p59, %p60
      %p62 = scmp.ne.s32.totalorder %s48, %s49
      %p63 = scmp.eq.s32.totalorder %s18, 47
      %p64 = por %p62, %p63
      %p66 = scmp.ne.s32.totalorder %s49, %s65
      %p67 = scmp.eq.s32.totalorder %s18, 0
      %p68 = por %p66, %p67
      %s70 = sadd.s32 %s69, 1
      %p73 = scmp.eq.s32.totalorder %s12, 47
      %p74 = scmp.ne.s32.totalorder %s69, %s71
      %p75 = scmp.eq.s32.totalorder %s12, 0
      %p76 = por %p74, %p75
      %p77 = scmp.ne.s32.totalorder %s69, %s71
      %p78 = scmp.eq.s32.totalorder %s17, 47
      %p79 = por %p77, %p78
      %p80 = scmp.ne.s32.totalorder %s71, %s72
      %p81 = scmp.eq.s32.totalorder %s17, 0
      %p82 = por %p80, %p81
      %p83 = scmp.ne.s32.totalorder %s71, %s72
      %p84 = scmp.eq.s32.totalorder %s18, 47
      %p85 = por %p83, %p84
      %p87 = scmp.ne.s32.totalorder %s72, %s86
      %p88 = scmp.eq.s32.totalorder %s18, 0
      %p89 = por %p87, %p88
      %s91 = sadd.s32 %s90, 1
      %p94 = scmp.eq.s32.totalorder %s12, 47
      %p95 = scmp.ne.s32.totalorder %s90, %s92
      %p96 = scmp.eq.s32.totalorder %s12, 0
      %p97 = por %p95, %p96
      %p98 = scmp.ne.s32.totalorder %s90, %s92
      %p99 = scmp.eq.s32.totalorder %s17, 47
      %p100 = por %p98, %p99
      %p101 = scmp.ne.s32.totalorder %s92, %s93
      %p102 = scmp.eq.s32.totalorder %s17, 0
      %p103 = por %p101, %p102
      %p104 = scmp.ne.s32.totalorder %s92, %s93
      %p105 = scmp.eq.s32.totalorder %s18, 47
      %p106 = por %p104, %p105
      %p108 = scmp.ne.s32.totalorder %s93, %s107
      %p109 = scmp.eq.s32.totalorder %s18, 0
      %p110 = por %p108, %p109
      %s111 = ssub.s32 %s19, %s38
      %s112 = ssub.s32 %s20, %s34
      %s113 = sor.u32 %s111, %s112
      %p114 = scmp.eq.s32.totalorder %s113, 0
      %s116 = sadd.s32 %s115, 1
      %s117 = scalar_select %p114, %s115, %s116
      %p120 = pneg %p114
      %p121 = scmp.eq.s32.totalorder %s12, 47
      %p122 = por %p120, %p121
      %p123 = scmp.ne.s32.totalorder %s115, %s118
      %p124 = scmp.eq.s32.totalorder %s12, 0
      %p125 = por %p123, %p124
      %p126 = scmp.ne.s32.totalorder %s115, %s118
      %p127 = scmp.eq.s32.totalorder %s17, 47
      %p128 = por %p126, %p127
      %p129 = scmp.ne.s32.totalorder %s118, %s119
      %p130 = scmp.eq.s32.totalorder %s17, 0
      %p131 = por %p129, %p130
      %p132 = scmp.ne.s32.totalorder %s118, %s119
      %p133 = scmp.eq.s32.totalorder %s18, 47
      %p134 = por %p132, %p133
      %p136 = scmp.ne.s32.totalorder %s119, %s135
      %p137 = scmp.eq.s32.totalorder %s18, 0
      %p138 = por %p136, %p137
      %p139 = scmp.le.s32.totalorder 1, %s12
      %p140 = scmp.lt.s32.totalorder %s12, 49
      %p141 = pnand %p139, %p140
      %p142 = pneg %p141
      // Predicated region
      $region9: #{tpu_custom_call.1} parent=5 // pred_check
        _
      $region10: #{tpu_custom_call.1} parent=5 // pred_check_branch
        %144 = sbr.rel (%p141) target = $region12
      $region11: #{tpu_custom_call.1} parent=5 // pred_region
        %s145 = ssub.s32 %s12, 1
        // Predicated region
        $region13: #{tpu_custom_call.1} parent=11 // pred_check
          %p146 = pneg %p82
        $region14: #{tpu_custom_call.1} parent=11 // pred_check_branch
          %148 = sbr.rel (%p146) target = $region16
        $region15: #{tpu_custom_call.1} parent=11 // pred_region
          _
        $region16: #{tpu_custom_call.1} parent=11 // pred_fallthru
          _
        // Predicated region
        $region17: #{tpu_custom_call.1} parent=11 // pred_check
          %p149 = pneg %p103
        $region18: #{tpu_custom_call.1} parent=11 // pred_check_branch
          %151 = sbr.rel (%p149) target = $region20
        $region19: #{tpu_custom_call.1} parent=11 // pred_region
          _
        $region20: #{tpu_custom_call.1} parent=11 // pred_fallthru
          _
      $region12: #{tpu_custom_call.1} parent=5 // pred_fallthru
        _
      %p152 = scmp.lt.s32.totalorder %s12, 48
      // Predicated region
      $region21: #{tpu_custom_call.1} parent=5 // pred_check
        %p153 = pneg %p152
      $region22: #{tpu_custom_call.1} parent=5 // pred_check_branch
        %155 = sbr.rel (%p153) target = $region24
      $region23: #{tpu_custom_call.1} parent=5 // pred_region
        // Predicated region
        $region25: #{tpu_custom_call.1} parent=23 // pred_check
          %p156 = pneg %p55
        $region26: #{tpu_custom_call.1} parent=23 // pred_check_branch
          %158 = sbr.rel (%p156) target = $region28
        $region27: #{tpu_custom_call.1} parent=23 // pred_region
          %s159 = sadd.s32 %s20, %s21
          %p160 = scmp.lt.s32.totalorder %s19, 1
          %s161 = scalar_select %p160, %s19, 1
          %p162 = scmp.lt.s32.totalorder %s159, 9
          %s163 = scalar_select %p162, %s159, 9
          %s164 = smul.addr %s163, 13
          %s165 = smul.addr %s161, 130
          %s166 = sadd.s32 %s164, %s165
          %s167 = smul.addr %s166, 4
          %s168 = scalar_lea.vmem %s0, %s167
          %s169 = sadd.s32 %s20, %s21
        $region28: #{tpu_custom_call.1} parent=23 // pred_fallthru
          _
      $region24: #{tpu_custom_call.1} parent=5 // pred_fallthru
        _
      %p170 = scmp.le.s32.totalorder 1, %s12
      %p171 = scmp.lt.s32.totalorder %s12, 49
      %p172 = pnand %p170, %p171
      %p173 = pneg %p172
      // Predicated region
      $region29: #{tpu_custom_call.1} parent=5 // pred_check
        _
      $region30: #{tpu_custom_call.1} parent=5 // pred_check_branch
        %175 = sbr.rel (%p172) target = $region32
      $region31: #{tpu_custom_call.1} parent=5 // pred_region
        %s176 = ssub.s32 %s12, 1
        %s177 = sadd.s32 %s23, %s24
        %p178 = scmp.lt.s32.totalorder %s22, 1
        %s179 = scalar_select %p178, %s22, 1
        %p180 = scmp.lt.s32.totalorder %s177, 9
        %s181 = scalar_select %p180, %s177, 9
        %s182 = smul.addr %s181, 13
        %s183 = smul.addr %s179, 130
        %s184 = sadd.s32 %s182, %s183
        %s185 = smul.addr %s184, 4
        %s186 = scalar_lea.vmem %s0, %s185
        %p187 = pneg %p61
        %p188 = pneg %p58
        %p189 = pneg %p82
        %p190 = pneg %p79
        %p191 = pneg %p103
        %p192 = pneg %p100
        %p193 = pneg %p131
        %p194 = pneg %p128
        %s195 = sand.u32 %s118, 1
        %s196 = scalar_lea.sflag [#allocation4], %s195
        %s197 = sand.u32 %s118, 1
        %s198 = smul.addr %s197, 32
        %s199 = scalar_lea.vmem [#allocation3], %s198
        %s200 = sadd.s32 %s23, %s24
        %p201 = scmp.lt.s32.totalorder %s22, 1
        %s202 = scalar_select %p201, %s22, 1
        %p203 = scmp.lt.s32.totalorder %s200, 9
        %s204 = scalar_select %p203, %s200, 9
        %s205 = smul.addr %s204, 13
        %s206 = smul.addr %s202, 130
        %s207 = sadd.s32 %s205, %s206
        %s208 = smul.addr %s207, 4
        %s209 = scalar_lea.vmem %s0, %s208
        %s210 = sadd.s32 %s23, %s24
        %p212 = scmp.eq.s32.totalorder %s24, 0
        // Predicated region
        $region33: #{tpu_custom_call.1} parent=31 // pred_check
          %p213 = pneg %p212
        $region34: #{tpu_custom_call.1} parent=31 // pred_check_branch
          %215 = sbr.rel (%p213) target = $region36
        $region35: #{tpu_custom_call.1} parent=31 // pred_region
          %216 = vst [vmem:[#allocation2] sm:$0xff] 0.0
          %217 = vst [vmem:[#allocation2 + $0x8] sm:$0xff] 0.0
          %218 = vst [vmem:[#allocation2 + $0x10] sm:$0xff] 0.0
          %219 = vst [vmem:[#allocation2 + $0x18] sm:$0xff] 0.0
          %220 = vst [vmem:[#allocation2 + $0x20] sm:$0xff] 0.0
          %221 = vst [vmem:[#allocation2 + $0x28] sm:$0xff] 0.0
          %222 = vst [vmem:[#allocation2 + $0x30] sm:$0xff] 0.0
          %223 = vst [vmem:[#allocation2 + $0x38] sm:$0xff] 0.0
          %224 = vst [vmem:[#allocation2 + $0x40] sm:$0xff] 0.0
          %225 = vst [vmem:[#allocation2 + $0x48] sm:$0x3f] 0.0
        $region36: #{tpu_custom_call.1} parent=31 // pred_fallthru
          _
        %v226 = vld [vmem:[#allocation2] sm:$0xff]
        %v227 = vld [vmem:[#allocation2 + $0x8] sm:$0xff]
        %v228 = vld [vmem:[#allocation2 + $0x10] sm:$0xff]
        %v229 = vld [vmem:[#allocation2 + $0x18] sm:$0xff]
        %v230 = vld [vmem:[#allocation2 + $0x20] sm:$0xff]
        %v231 = vld [vmem:[#allocation2 + $0x28] sm:$0xff]
        %v232 = vld [vmem:[#allocation2 + $0x30] sm:$0xff]
        %v233 = vld [vmem:[#allocation2 + $0x38] sm:$0xff]
        %v234 = vld [vmem:[#allocation2 + $0x40] sm:$0xff]
        %v235 = vld [vmem:[#allocation2 + $0x48] sm:$0x3f]
        %v236 = vld [vmem:[%s209] sm:$0xf]
        %v237 = vld [vmem:[%s209 + $0x4] sm:$0xf]
        %v238 = vld [vmem:[%s209 + $0x8] sm:$0xf]
        %v239 = vld [vmem:[%s209 + $0xc] sm:$0xf]
        %v240 = vld [vmem:[%s209 + $0x10] sm:$0xf]
        %v241 = vld [vmem:[%s209 + $0x14] sm:$0xf]
        %v242 = vld [vmem:[%s209 + $0x18] sm:$0xf]
        %v243 = vld [vmem:[%s209 + $0x1c] sm:$0xf]
        %v244 = vld [vmem:[%s209 + $0x20] sm:$0xf]
        %v245 = vld [vmem:[%s209 + $0x24] sm:$0x7]
        %s246 = smul.u32 %s24, 9
        %s247 = smul.addr %s246, 2
        %s248 = scalar_lea.vmem %s1, %s247
        %v249 = vld [vmem:[%s248] sm:$0x3]
        %v260 = vunpack.c.l.b16 %v236
        %v261 = vunpack.c.l.b16 %v237
        %v262 = vunpack.c.l.b16 %v238
        %v263 = vunpack.c.l.b16 %v239
        %v264 = vunpack.c.l.b16 %v240
        %v265 = vunpack.c.l.b16 %v241
        %v266 = vunpack.c.l.b16 %v242
        %v267 = vunpack.c.l.b16 %v243
        %v268 = vunpack.c.l.b16 %v244
        %v269 = vunpack.c.l.b16 %v245
        %v270 = vpack.c.b16 %v261, %v260
        %v271 = vpack.c.b16 %v263, %v262
        %v272 = vpack.c.b16 %v265, %v264
        %v273 = vpack.c.b16 %v267, %v266
        %v274 = vpack.c.b16 %v269, %v268
        %vm275 = vcmask 31744
        %v277 = vsel %vm275, %v270, 0
        %v280 = vsel %vm275, %v271, 0
        %v283 = vsel %vm275, %v272, 0
        %v286 = vsel %vm275, %v273, 0
        %v289 = vsel %vm275, %v274, 0
        %vm291 = vcmask 1041408
        %v293 = vsel %vm291, %v249, 0
        %295 = vmatprep.subr.bf16.mxu0 0
        %296 = vmatpush1.bf16.msra.mxu0 0
        %297 = vmatprep.subr.bf16.mxu0 0
        %298 = vmatpush1.bf16.msra.mxu0 0
        %299 = vmatprep.subr.bf16.mxu0 0
        %300 = vmatpush1.bf16.msra.mxu0 0
        %301 = vmatprep.subr.bf16.mxu0 0
        %302 = vmatpush1.bf16.msra.mxu0 0
        %303 = vmatprep.subr.bf16.mxu0 0
        %304 = vmatpush1.bf16.msra.mxu0 0
        %305 = vmatprep.subr.bf16.mxu0 0
        %306 = vmatpush1.bf16.msra.mxu0 0
        %307 = vmatprep.subr.bf16.mxu0 0
        %308 = vmatpush1.bf16.msra.mxu0 0
        %309 = vmatprep.subr.bf16.mxu0 0
        %310 = vmatpush1.bf16.msra.mxu0 %v293
        %311 = vmatprep.subr.bf16.mxu0 0
        %312 = vmatpush2.bf16.msra.mxu0 0
        %313 = vmatprep.subr.bf16.mxu0 0
        %314 = vmatpush2.bf16.msra.mxu0 0
        %315 = vmatprep.subr.bf16.mxu0 0
        %316 = vmatpush2.bf16.msra.mxu0 0
        %317 = vmatprep.subr.bf16.mxu0 0
        %318 = vmatpush2.bf16.msra.mxu0 0
        %319 = vmatprep.subr.bf16.mxu0 0
        %320 = vmatpush2.bf16.msra.mxu0 0
        %321 = vmatprep.subr.bf16.mxu0 0
        %322 = vmatpush2.bf16.msra.mxu0 0
        %323 = vmatprep.subr.bf16.mxu0 0
        %324 = vmatpush2.bf16.msra.mxu0 0
        %325 = vmatprep.subr.bf16.mxu0 0
        %326 = vmatpush2.bf16.msra.mxu0 0
        %327 = vmatprep.mubr.bf16.mxu0 0
        %328 = vmatmul.mubr.bf16.gmra.mxu0 %v277
        %v329 = vpop.f32.mrf.mxu0
        %v330 = vadd.f32 0.0, %v329
        %v331 = vpop.f32.mrf.mxu0
        %v332 = vpop.f32.mrf.mxu0
        %v333 = vadd.f32 0.0, %v332
        %v334 = vpop.f32.mrf.mxu0
        %335 = vmatprep.mubr.bf16.mxu0 0
        %336 = vmatmul.mubr.bf16.gmra.mxu0 %v280
        %v337 = vpop.f32.mrf.mxu0
        %v338 = vadd.f32 0.0, %v337
        %v339 = vpop.f32.mrf.mxu0
        %v340 = vpop.f32.mrf.mxu0
        %v341 = vadd.f32 0.0, %v340
        %v342 = vpop.f32.mrf.mxu0
        %343 = vmatprep.mubr.bf16.mxu0 0
        %344 = vmatmul.mubr.bf16.gmra.mxu0 %v283
        %v345 = vpop.f32.mrf.mxu0
        %v346 = vadd.f32 0.0, %v345
        %v347 = vpop.f32.mrf.mxu0
        %v348 = vpop.f32.mrf.mxu0
        %v349 = vadd.f32 0.0, %v348
        %v350 = vpop.f32.mrf.mxu0
        %351 = vmatprep.mubr.bf16.mxu0 0
        %352 = vmatmul.mubr.bf16.gmra.mxu0 %v286
        %v353 = vpop.f32.mrf.mxu0
        %v354 = vadd.f32 0.0, %v353
        %v355 = vpop.f32.mrf.mxu0
        %v356 = vpop.f32.mrf.mxu0
        %v357 = vadd.f32 0.0, %v356
        %v358 = vpop.f32.mrf.mxu0
        %359 = vmatprep.mubr.bf16.mxu0 0
        %360 = vmatmul.mubr.bf16.gmra.mxu0 %v289
        %v361 = vpop.f32.mrf.mxu0
        %v362 = vadd.f32 0.0, %v361
        %v363 = vpop.f32.mrf.mxu0
        %v364 = vpop.f32.mrf.mxu0
        %v365 = vadd.f32 0.0, %v364
        %v366 = vpop.f32.mrf.mxu0
        %367 = vdwg.mxu0
        %v368 = vadd.f32 %v226, %v330
        %v369 = vadd.f32 %v227, %v333
        %v370 = vadd.f32 %v228, %v338
        %v371 = vadd.f32 %v229, %v341
        %v372 = vadd.f32 %v230, %v346
        %v373 = vadd.f32 %v231, %v349
        %v374 = vadd.f32 %v232, %v354
        %v375 = vadd.f32 %v233, %v357
        %v376 = vadd.f32 %v234, %v362
        %v377 = vadd.f32 %v235, %v365
        %v378 = vld [vmem:[%s209 + $0x24] sm:$0xf]
        %s379 = sadd.s32 %s246, 1
        %s380 = smul.addr %s379, 2
        %s381 = scalar_lea.vmem %s1, %s380
        %v382 = vld [vmem:[%s381] sm:$0x3]
        %v384 = vunpack.c.l.b16 %v378
        %v385 = vpack.c.b16 %v384, %v268
        %vm386 = vsmask.f32 7424
        %v387 = vshrl.u32 %v270, 16
        %v389 = vshll.u32 %v270, 16
        %v391 = vrot.slane %v389, 1
        %v392 = vor.u32 %v387, %v391
        %v393 = vshll.u32 %v271, 16
        %v395 = vrot.slane %v393, 1
        %v396 = vsel %vm386, %v392, %v395
        %v397 = vshrl.u32 %v271, 16
        %v399 = vor.u32 %v397, %v395
        %v400 = vshll.u32 %v272, 16
        %v402 = vrot.slane %v400, 1
        %v403 = vsel %vm386, %v399, %v402
        %v404 = vshrl.u32 %v272, 16
        %v406 = vor.u32 %v404, %v402
        %v407 = vshll.u32 %v273, 16
        %v409 = vrot.slane %v407, 1
        %v410 = vsel %vm386, %v406, %v409
        %v411 = vshrl.u32 %v273, 16
        %v413 = vor.u32 %v411, %v409
        %v415 = vshll.u32 %v385, 16
        %v417 = vrot.slane %v415, 1
        %v418 = vsel %vm386, %v413, %v417
        %v419 = vshrl.u32 %v385, 16
        %v421 = vor.u32 %v419, %v417
        %v423 = vsel %vm275, %v396, 0
        %v426 = vsel %vm275, %v403, 0
        %v429 = vsel %vm275, %v410, 0
        %v432 = vsel %vm275, %v418, 0
        %v435 = vsel %vm275, %v421, 0
        %v438 = vsel %vm291, %v382, 0
        %440 = vmatprep.subr.bf16.mxu0 0
        %441 = vmatpush1.bf16.msra.mxu0 0
        %442 = vmatprep.subr.bf16.mxu0 0
        %443 = vmatpush1.bf16.msra.mxu0 0
        %444 = vmatprep.subr.bf16.mxu0 0
        %445 = vmatpush1.bf16.msra.mxu0 0
        %446 = vmatprep.subr.bf16.mxu0 0
        %447 = vmatpush1.bf16.msra.mxu0 0
        %448 = vmatprep.subr.bf16.mxu0 0
        %449 = vmatpush1.bf16.msra.mxu0 0
        %450 = vmatprep.subr.bf16.mxu0 0
        %451 = vmatpush1.bf16.msra.mxu0 0
        %452 = vmatprep.subr.bf16.mxu0 0
        %453 = vmatpush1.bf16.msra.mxu0 0
        %454 = vmatprep.subr.bf16.mxu0 0
        %455 = vmatpush1.bf16.msra.mxu0 %v438
        %456 = vmatprep.subr.bf16.mxu0 0
        %457 = vmatpush2.bf16.msra.mxu0 0
        %458 = vmatprep.subr.bf16.mxu0 0
        %459 = vmatpush2.bf16.msra.mxu0 0
        %460 = vmatprep.subr.bf16.mxu0 0
        %461 = vmatpush2.bf16.msra.mxu0 0
        %462 = vmatprep.subr.bf16.mxu0 0
        %463 = vmatpush2.bf16.msra.mxu0 0
        %464 = vmatprep.subr.bf16.mxu0 0
        %465 = vmatpush2.bf16.msra.mxu0 0
        %466 = vmatprep.subr.bf16.mxu0 0
        %467 = vmatpush2.bf16.msra.mxu0 0
        %468 = vmatprep.subr.bf16.mxu0 0
        %469 = vmatpush2.bf16.msra.mxu0 0
        %470 = vmatprep.subr.bf16.mxu0 0
        %471 = vmatpush2.bf16.msra.mxu0 0
        %472 = vmatprep.mubr.bf16.mxu0 0
        %473 = vmatmul.mubr.bf16.gmra.mxu0 %v423
        %v474 = vpop.f32.mrf.mxu0
        %v475 = vadd.f32 0.0, %v474
        %v476 = vpop.f32.mrf.mxu0
        %v477 = vpop.f32.mrf.mxu0
        %v478 = vadd.f32 0.0, %v477
        %v479 = vpop.f32.mrf.mxu0
        %480 = vmatprep.mubr.bf16.mxu0 0
        %481 = vmatmul.mubr.bf16.gmra.mxu0 %v426
        %v482 = vpop.f32.mrf.mxu0
        %v483 = vadd.f32 0.0, %v482
        %v484 = vpop.f32.mrf.mxu0
        %v485 = vpop.f32.mrf.mxu0
        %v486 = vadd.f32 0.0, %v485
        %v487 = vpop.f32.mrf.mxu0
        %488 = vmatprep.mubr.bf16.mxu0 0
        %489 = vmatmul.mubr.bf16.gmra.mxu0 %v429
        %v490 = vpop.f32.mrf.mxu0
        %v491 = vadd.f32 0.0, %v490
        %v492 = vpop.f32.mrf.mxu0
        %v493 = vpop.f32.mrf.mxu0
        %v494 = vadd.f32 0.0, %v493
        %v495 = vpop.f32.mrf.mxu0
        %496 = vmatprep.mubr.bf16.mxu0 0
        %497 = vmatmul.mubr.bf16.gmra.mxu0 %v432
        %v498 = vpop.f32.mrf.mxu0
        %v499 = vadd.f32 0.0, %v498
        %v500 = vpop.f32.mrf.mxu0
        %v501 = vpop.f32.mrf.mxu0
        %v502 = vadd.f32 0.0, %v501
        %v503 = vpop.f32.mrf.mxu0
        %504 = vmatprep.mubr.bf16.mxu0 0
        %505 = vmatmul.mubr.bf16.gmra.mxu0 %v435
        %v506 = vpop.f32.mrf.mxu0
        %v507 = vadd.f32 0.0, %v506
        %v508 = vpop.f32.mrf.mxu0
        %v509 = vpop.f32.mrf.mxu0
        %v510 = vadd.f32 0.0, %v509
        %v511 = vpop.f32.mrf.mxu0
        %512 = vdwg.mxu0
        %v513 = vadd.f32 %v368, %v475
        %v514 = vadd.f32 %v369, %v478
        %v515 = vadd.f32 %v370, %v483
        %v516 = vadd.f32 %v371, %v486
        %v517 = vadd.f32 %v372, %v491
        %v518 = vadd.f32 %v373, %v494
        %v519 = vadd.f32 %v374, %v499
        %v520 = vadd.f32 %v375, %v502
        %v521 = vadd.f32 %v376, %v507
        %v522 = vadd.f32 %v377, %v510
        %v523 = vld [vmem:[%s209] sm:$0xe]
        %s524 = sadd.s32 %s246, 2
        %s525 = smul.addr %s524, 2
        %s526 = scalar_lea.vmem %s1, %s525
        %v527 = vld [vmem:[%s526] sm:$0x3]
        %v529 = vunpack.c.l.b16 %v523
        %v530 = vpack.c.b16 %v261, %v529
        %vm531 = vcmask 1046528
        %v532 = vrot.slane %v530, 1
        %v533 = vrot.slane %v271, 1
        %v534 = vsel %vm531, %v532, %v533
        %v535 = vrot.slane %v272, 1
        %v536 = vsel %vm531, %v533, %v535
        %v537 = vrot.slane %v273, 1
        %v538 = vsel %vm531, %v535, %v537
        %v539 = vrot.slane %v385, 1
        %v540 = vsel %vm531, %v537, %v539
        %v542 = vsel %vm275, %v534, 0
        %v545 = vsel %vm275, %v536, 0
        %v548 = vsel %vm275, %v538, 0
        %v551 = vsel %vm275, %v540, 0
        %v554 = vsel %vm275, %v539, 0
        %v557 = vsel %vm291, %v527, 0
        %559 = vmatprep.subr.bf16.mxu0 0
        %560 = vmatpush1.bf16.msra.mxu0 0
        %561 = vmatprep.subr.bf16.mxu0 0
        %562 = vmatpush1.bf16.msra.mxu0 0
        %563 = vmatprep.subr.bf16.mxu0 0
        %564 = vmatpush1.bf16.msra.mxu0 0
        %565 = vmatprep.subr.bf16.mxu0 0
        %566 = vmatpush1.bf16.msra.mxu0 0
        %567 = vmatprep.subr.bf16.mxu0 0
        %568 = vmatpush1.bf16.msra.mxu0 0
        %569 = vmatprep.subr.bf16.mxu0 0
        %570 = vmatpush1.bf16.msra.mxu0 0
        %571 = vmatprep.subr.bf16.mxu0 0
        %572 = vmatpush1.bf16.msra.mxu0 0
        %573 = vmatprep.subr.bf16.mxu0 0
        %574 = vmatpush1.bf16.msra.mxu0 %v557
        %575 = vmatprep.subr.bf16.mxu0 0
        %576 = vmatpush2.bf16.msra.mxu0 0
        %577 = vmatprep.subr.bf16.mxu0 0
        %578 = vmatpush2.bf16.msra.mxu0 0
        %579 = vmatprep.subr.bf16.mxu0 0
        %580 = vmatpush2.bf16.msra.mxu0 0
        %581 = vmatprep.subr.bf16.mxu0 0
        %582 = vmatpush2.bf16.msra.mxu0 0
        %583 = vmatprep.subr.bf16.mxu0 0
        %584 = vmatpush2.bf16.msra.mxu0 0
        %585 = vmatprep.subr.bf16.mxu0 0
        %586 = vmatpush2.bf16.msra.mxu0 0
        %587 = vmatprep.subr.bf16.mxu0 0
        %588 = vmatpush2.bf16.msra.mxu0 0
        %589 = vmatprep.subr.bf16.mxu0 0
        %590 = vmatpush2.bf16.msra.mxu0 0
        %591 = vmatprep.mubr.bf16.mxu0 0
        %592 = vmatmul.mubr.bf16.gmra.mxu0 %v542
        %v593 = vpop.f32.mrf.mxu0
        %v594 = vadd.f32 0.0, %v593
        %v595 = vpop.f32.mrf.mxu0
        %v596 = vpop.f32.mrf.mxu0
        %v597 = vadd.f32 0.0, %v596
        %v598 = vpop.f32.mrf.mxu0
        %599 = vmatprep.mubr.bf16.mxu0 0
        %600 = vmatmul.mubr.bf16.gmra.mxu0 %v545
        %v601 = vpop.f32.mrf.mxu0
        %v602 = vadd.f32 0.0, %v601
        %v603 = vpop.f32.mrf.mxu0
        %v604 = vpop.f32.mrf.mxu0
        %v605 = vadd.f32 0.0, %v604
        %v606 = vpop.f32.mrf.mxu0
        %607 = vmatprep.mubr.bf16.mxu0 0
        %608 = vmatmul.mubr.bf16.gmra.mxu0 %v548
        %v609 = vpop.f32.mrf.mxu0
        %v610 = vadd.f32 0.0, %v609
        %v611 = vpop.f32.mrf.mxu0
        %v612 = vpop.f32.mrf.mxu0
        %v613 = vadd.f32 0.0, %v612
        %v614 = vpop.f32.mrf.mxu0
        %615 = vmatprep.mubr.bf16.mxu0 0
        %616 = vmatmul.mubr.bf16.gmra.mxu0 %v551
        %v617 = vpop.f32.mrf.mxu0
        %v618 = vadd.f32 0.0, %v617
        %v619 = vpop.f32.mrf.mxu0
        %v620 = vpop.f32.mrf.mxu0
        %v621 = vadd.f32 0.0, %v620
        %v622 = vpop.f32.mrf.mxu0
        %623 = vmatprep.mubr.bf16.mxu0 0
        %624 = vmatmul.mubr.bf16.gmra.mxu0 %v554
        %v625 = vpop.f32.mrf.mxu0
        %v626 = vadd.f32 0.0, %v625
        %v627 = vpop.f32.mrf.mxu0
        %v628 = vpop.f32.mrf.mxu0
        %v629 = vadd.f32 0.0, %v628
        %v630 = vpop.f32.mrf.mxu0
        %631 = vdwg.mxu0
        %v632 = vadd.f32 %v513, %v594
        %v633 = vadd.f32 %v514, %v597
        %v634 = vadd.f32 %v515, %v602
        %v635 = vadd.f32 %v516, %v605
        %v636 = vadd.f32 %v517, %v610
        %v637 = vadd.f32 %v518, %v613
        %v638 = vadd.f32 %v519, %v618
        %v639 = vadd.f32 %v520, %v621
        %v640 = vadd.f32 %v521, %v626
        %v641 = vadd.f32 %v522, %v629
        %v642 = vld [vmem:[%s209 + $0x4] sm:$0xe]
        %v643 = vld [vmem:[%s209 + $0x8] sm:$0xf]
        %v644 = vld [vmem:[%s209 + $0xc] sm:$0xf]
        %v645 = vld [vmem:[%s209 + $0x10] sm:$0xf]
        %v646 = vld [vmem:[%s209 + $0x14] sm:$0xf]
        %v647 = vld [vmem:[%s209 + $0x18] sm:$0xf]
        %v648 = vld [vmem:[%s209 + $0x1c] sm:$0xf]
        %v649 = vld [vmem:[%s209 + $0x20] sm:$0xf]
        %v650 = vld [vmem:[%s209 + $0x24] sm:$0xf]
        %v651 = vld [vmem:[%s209 + $0x28] sm:$0xf]
        %s652 = sadd.s32 %s246, 3
        %s653 = smul.addr %s652, 2
        %s654 = scalar_lea.vmem %s1, %s653
        %v655 = vld [vmem:[%s654] sm:$0x3]
        %v666 = vunpack.c.l.b16 %v642
        %v667 = vunpack.c.l.b16 %v643
        %v668 = vunpack.c.l.b16 %v644
        %v669 = vunpack.c.l.b16 %v645
        %v670 = vunpack.c.l.b16 %v646
        %v671 = vunpack.c.l.b16 %v647
        %v672 = vunpack.c.l.b16 %v648
        %v673 = vunpack.c.l.b16 %v649
        %v674 = vunpack.c.l.b16 %v650
        %v675 = vunpack.c.l.b16 %v651
        %v676 = vpack.c.b16 %v667, %v666
        %v677 = vpack.c.b16 %v669, %v668
        %v678 = vpack.c.b16 %v671, %v670
        %v679 = vpack.c.b16 %v673, %v672
        %v680 = vpack.c.b16 %v675, %v674
        %v681 = vrot.slane %v676, 1
        %v682 = vrot.slane %v677, 1
        %v683 = vsel %vm531, %v681, %v682
        %v684 = vrot.slane %v678, 1
        %v685 = vsel %vm531, %v682, %v684
        %v686 = vrot.slane %v679, 1
        %v687 = vsel %vm531, %v684, %v686
        %v688 = vrot.slane %v680, 1
        %v689 = vsel %vm531, %v686, %v688
        %v691 = vsel %vm275, %v683, 0
        %v694 = vsel %vm275, %v685, 0
        %v697 = vsel %vm275, %v687, 0
        %v700 = vsel %vm275, %v689, 0
        %v703 = vsel %vm275, %v688, 0
        %v706 = vsel %vm291, %v655, 0
        %708 = vmatprep.subr.bf16.mxu0 0
        %709 = vmatpush1.bf16.msra.mxu0 0
        %710 = vmatprep.subr.bf16.mxu0 0
        %711 = vmatpush1.bf16.msra.mxu0 0
        %712 = vmatprep.subr.bf16.mxu0 0
        %713 = vmatpush1.bf16.msra.mxu0 0
        %714 = vmatprep.subr.bf16.mxu0 0
        %715 = vmatpush1.bf16.msra.mxu0 0
        %716 = vmatprep.subr.bf16.mxu0 0
        %717 = vmatpush1.bf16.msra.mxu0 0
        %718 = vmatprep.subr.bf16.mxu0 0
        %719 = vmatpush1.bf16.msra.mxu0 0
        %720 = vmatprep.subr.bf16.mxu0 0
        %721 = vmatpush1.bf16.msra.mxu0 0
        %722 = vmatprep.subr.bf16.mxu0 0
        %723 = vmatpush1.bf16.msra.mxu0 %v706
        %724 = vmatprep.subr.bf16.mxu0 0
        %725 = vmatpush2.bf16.msra.mxu0 0
        %726 = vmatprep.subr.bf16.mxu0 0
        %727 = vmatpush2.bf16.msra.mxu0 0
        %728 = vmatprep.subr.bf16.mxu0 0
        %729 = vmatpush2.bf16.msra.mxu0 0
        %730 = vmatprep.subr.bf16.mxu0 0
        %731 = vmatpush2.bf16.msra.mxu0 0
        %732 = vmatprep.subr.bf16.mxu0 0
        %733 = vmatpush2.bf16.msra.mxu0 0
        %734 = vmatprep.subr.bf16.mxu0 0
        %735 = vmatpush2.bf16.msra.mxu0 0
        %736 = vmatprep.subr.bf16.mxu0 0
        %737 = vmatpush2.bf16.msra.mxu0 0
        %738 = vmatprep.subr.bf16.mxu0 0
        %739 = vmatpush2.bf16.msra.mxu0 0
        %740 = vmatprep.mubr.bf16.mxu0 0
        %741 = vmatmul.mubr.bf16.gmra.mxu0 %v691
        %v742 = vpop.f32.mrf.mxu0
        %v743 = vadd.f32 0.0, %v742
        %v744 = vpop.f32.mrf.mxu0
        %v745 = vpop.f32.mrf.mxu0
        %v746 = vadd.f32 0.0, %v745
        %v747 = vpop.f32.mrf.mxu0
        %748 = vmatprep.mubr.bf16.mxu0 0
        %749 = vmatmul.mubr.bf16.gmra.mxu0 %v694
        %v750 = vpop.f32.mrf.mxu0
        %v751 = vadd.f32 0.0, %v750
        %v752 = vpop.f32.mrf.mxu0
        %v753 = vpop.f32.mrf.mxu0
        %v754 = vadd.f32 0.0, %v753
        %v755 = vpop.f32.mrf.mxu0
        %756 = vmatprep.mubr.bf16.mxu0 0
        %757 = vmatmul.mubr.bf16.gmra.mxu0 %v697
        %v758 = vpop.f32.mrf.mxu0
        %v759 = vadd.f32 0.0, %v758
        %v760 = vpop.f32.mrf.mxu0
        %v761 = vpop.f32.mrf.mxu0
        %v762 = vadd.f32 0.0, %v761
        %v763 = vpop.f32.mrf.mxu0
        %764 = vmatprep.mubr.bf16.mxu0 0
        %765 = vmatmul.mubr.bf16.gmra.mxu0 %v700
        %v766 = vpop.f32.mrf.mxu0
        %v767 = vadd.f32 0.0, %v766
        %v768 = vpop.f32.mrf.mxu0
        %v769 = vpop.f32.mrf.mxu0
        %v770 = vadd.f32 0.0, %v769
        %v771 = vpop.f32.mrf.mxu0
        %772 = vmatprep.mubr.bf16.mxu0 0
        %773 = vmatmul.mubr.bf16.gmra.mxu0 %v703
        %v774 = vpop.f32.mrf.mxu0
        %v775 = vadd.f32 0.0, %v774
        %v776 = vpop.f32.mrf.mxu0
        %v777 = vpop.f32.mrf.mxu0
        %v778 = vadd.f32 0.0, %v777
        %v779 = vpop.f32.mrf.mxu0
        %780 = vdwg.mxu0
        %v781 = vadd.f32 %v632, %v743
        %v782 = vadd.f32 %v633, %v746
        %v783 = vadd.f32 %v634, %v751
        %v784 = vadd.f32 %v635, %v754
        %v785 = vadd.f32 %v636, %v759
        %v786 = vadd.f32 %v637, %v762
        %v787 = vadd.f32 %v638, %v767
        %v788 = vadd.f32 %v639, %v770
        %v789 = vadd.f32 %v640, %v775
        %v790 = vadd.f32 %v641, %v778
        %v791 = vld [vmem:[%s209 + $0x4] sm:$0xe]
        %v792 = vld [vmem:[%s209 + $0x8] sm:$0xf]
        %v793 = vld [vmem:[%s209 + $0xc] sm:$0xf]
        %v794 = vld [vmem:[%s209 + $0x10] sm:$0xf]
        %v795 = vld [vmem:[%s209 + $0x14] sm:$0xf]
        %v796 = vld [vmem:[%s209 + $0x18] sm:$0xf]
        %v797 = vld [vmem:[%s209 + $0x1c] sm:$0xf]
        %v798 = vld [vmem:[%s209 + $0x20] sm:$0xf]
        %v799 = vld [vmem:[%s209 + $0x24] sm:$0xf]
        %v800 = vld [vmem:[%s209 + $0x28] sm:$0xf]
        %v801 = vld [vmem:[%s209 + $0x2c] sm:$0x1]
        %s802 = sadd.s32 %s246, 4
        %s803 = smul.addr %s802, 2
        %s804 = scalar_lea.vmem %s1, %s803
        %v805 = vld [vmem:[%s804] sm:$0x3]
        %v817 = vunpack.c.l.b16 %v791
        %v818 = vunpack.c.l.b16 %v792
        %v819 = vunpack.c.l.b16 %v793
        %v820 = vunpack.c.l.b16 %v794
        %v821 = vunpack.c.l.b16 %v795
        %v822 = vunpack.c.l.b16 %v796
        %v823 = vunpack.c.l.b16 %v797
        %v824 = vunpack.c.l.b16 %v798
        %v825 = vunpack.c.l.b16 %v799
        %v826 = vunpack.c.l.b16 %v800
        %v827 = vunpack.c.l.b16 %v801
        %v828 = vpack.c.b16 %v818, %v817
        %v829 = vpack.c.b16 %v820, %v819
        %v830 = vpack.c.b16 %v822, %v821
        %v831 = vpack.c.b16 %v824, %v823
        %v832 = vpack.c.b16 %v826, %v825
        %v833 = vpack.c.b16 %v827, %v827
        %vm834 = vsmask.f32 6400
        %v836 = vshrl.u32 %v828, 16
        %v838 = vrot.slane %v836, 1
        %v839 = vshll.u32 %v828, 16
        %v841 = vrot.slane %v839, 2
        %v842 = vor.u32 %v838, %v841
        %v844 = vshrl.u32 %v829, 16
        %v846 = vrot.slane %v844, 1
        %v847 = vshll.u32 %v829, 16
        %v849 = vrot.slane %v847, 2
        %v850 = vor.u32 %v846, %v849
        %v851 = vsel %vm834, %v842, %v850
        %v853 = vshrl.u32 %v830, 16
        %v855 = vrot.slane %v853, 1
        %v856 = vshll.u32 %v830, 16
        %v858 = vrot.slane %v856, 2
        %v859 = vor.u32 %v855, %v858
        %v860 = vsel %vm834, %v850, %v859
        %v862 = vshrl.u32 %v831, 16
        %v864 = vrot.slane %v862, 1
        %v865 = vshll.u32 %v831, 16
        %v867 = vrot.slane %v865, 2
        %v868 = vor.u32 %v864, %v867
        %v869 = vsel %vm834, %v859, %v868
        %v871 = vshrl.u32 %v832, 16
        %v873 = vrot.slane %v871, 1
        %v874 = vshll.u32 %v832, 16
        %v876 = vrot.slane %v874, 2
        %v877 = vor.u32 %v873, %v876
        %v878 = vsel %vm834, %v868, %v877
        %v880 = vshll.u32 %v833, 16
        %v882 = vrot.slane %v880, 2
        %v883 = vsel %vm834, %v877, %v882
        %v885 = vsel %vm275, %v851, 0
        %v888 = vsel %vm275, %v860, 0
        %v891 = vsel %vm275, %v869, 0
        %v894 = vsel %vm275, %v878, 0
        %v897 = vsel %vm275, %v883, 0
        %v900 = vsel %vm291, %v805, 0
        %902 = vmatprep.subr.bf16.mxu0 0
        %903 = vmatpush1.bf16.msra.mxu0 0
        %904 = vmatprep.subr.bf16.mxu0 0
        %905 = vmatpush1.bf16.msra.mxu0 0
        %906 = vmatprep.subr.bf16.mxu0 0
        %907 = vmatpush1.bf16.msra.mxu0 0
        %908 = vmatprep.subr.bf16.mxu0 0
        %909 = vmatpush1.bf16.msra.mxu0 0
        %910 = vmatprep.subr.bf16.mxu0 0
        %911 = vmatpush1.bf16.msra.mxu0 0
        %912 = vmatprep.subr.bf16.mxu0 0
        %913 = vmatpush1.bf16.msra.mxu0 0
        %914 = vmatprep.subr.bf16.mxu0 0
        %915 = vmatpush1.bf16.msra.mxu0 0
        %916 = vmatprep.subr.bf16.mxu0 0
        %917 = vmatpush1.bf16.msra.mxu0 %v900
        %918 = vmatprep.subr.bf16.mxu0 0
        %919 = vmatpush2.bf16.msra.mxu0 0
        %920 = vmatprep.subr.bf16.mxu0 0
        %921 = vmatpush2.bf16.msra.mxu0 0
        %922 = vmatprep.subr.bf16.mxu0 0
        %923 = vmatpush2.bf16.msra.mxu0 0
        %924 = vmatprep.subr.bf16.mxu0 0
        %925 = vmatpush2.bf16.msra.mxu0 0
        %926 = vmatprep.subr.bf16.mxu0 0
        %927 = vmatpush2.bf16.msra.mxu0 0
        %928 = vmatprep.subr.bf16.mxu0 0
        %929 = vmatpush2.bf16.msra.mxu0 0
        %930 = vmatprep.subr.bf16.mxu0 0
        %931 = vmatpush2.bf16.msra.mxu0 0
        %932 = vmatprep.subr.bf16.mxu0 0
        %933 = vmatpush2.bf16.msra.mxu0 0
        %934 = vmatprep.mubr.bf16.mxu0 0
        %935 = vmatmul.mubr.bf16.gmra.mxu0 %v885
        %v936 = vpop.f32.mrf.mxu0
        %v937 = vadd.f32 0.0, %v936
        %v938 = vpop.f32.mrf.mxu0
        %v939 = vpop.f32.mrf.mxu0
        %v940 = vadd.f32 0.0, %v939
        %v941 = vpop.f32.mrf.mxu0
        %942 = vmatprep.mubr.bf16.mxu0 0
        %943 = vmatmul.mubr.bf16.gmra.mxu0 %v888
        %v944 = vpop.f32.mrf.mxu0
        %v945 = vadd.f32 0.0, %v944
        %v946 = vpop.f32.mrf.mxu0
        %v947 = vpop.f32.mrf.mxu0
        %v948 = vadd.f32 0.0, %v947
        %v949 = vpop.f32.mrf.mxu0
        %950 = vmatprep.mubr.bf16.mxu0 0
        %951 = vmatmul.mubr.bf16.gmra.mxu0 %v891
        %v952 = vpop.f32.mrf.mxu0
        %v953 = vadd.f32 0.0, %v952
        %v954 = vpop.f32.mrf.mxu0
        %v955 = vpop.f32.mrf.mxu0
        %v956 = vadd.f32 0.0, %v955
        %v957 = vpop.f32.mrf.mxu0
        %958 = vmatprep.mubr.bf16.mxu0 0
        %959 = vmatmul.mubr.bf16.gmra.mxu0 %v894
        %v960 = vpop.f32.mrf.mxu0
        %v961 = vadd.f32 0.0, %v960
        %v962 = vpop.f32.mrf.mxu0
        %v963 = vpop.f32.mrf.mxu0
        %v964 = vadd.f32 0.0, %v963
        %v965 = vpop.f32.mrf.mxu0
        %966 = vmatprep.mubr.bf16.mxu0 0
        %967 = vmatmul.mubr.bf16.gmra.mxu0 %v897
        %v968 = vpop.f32.mrf.mxu0
        %v969 = vadd.f32 0.0, %v968
        %v970 = vpop.f32.mrf.mxu0
        %v971 = vpop.f32.mrf.mxu0
        %v972 = vadd.f32 0.0, %v971
        %v973 = vpop.f32.mrf.mxu0
        %974 = vdwg.mxu0
        %v975 = vadd.f32 %v781, %v937
        %v976 = vadd.f32 %v782, %v940
        %v977 = vadd.f32 %v783, %v945
        %v978 = vadd.f32 %v784, %v948
        %v979 = vadd.f32 %v785, %v953
        %v980 = vadd.f32 %v786, %v956
        %v981 = vadd.f32 %v787, %v961
        %v982 = vadd.f32 %v788, %v964
        %v983 = vadd.f32 %v789, %v969
        %v984 = vadd.f32 %v790, %v972
        %v985 = vld [vmem:[%s209 + $0x4] sm:$0xc]
        %s986 = sadd.s32 %s246, 5
        %s987 = smul.addr %s986, 2
        %s988 = scalar_lea.vmem %s1, %s987
        %v989 = vld [vmem:[%s988] sm:$0x3]
        %v991 = vunpack.c.l.b16 %v985
        %v992 = vpack.c.b16 %v818, %v991
        %vm993 = vcmask 1045504
        %v994 = vrot.slane %v992, 2
        %v995 = vrot.slane %v829, 2
        %v996 = vsel %vm993, %v994, %v995
        %v997 = vrot.slane %v830, 2
        %v998 = vsel %vm993, %v995, %v997
        %v999 = vrot.slane %v831, 2
        %v1000 = vsel %vm993, %v997, %v999
        %v1001 = vrot.slane %v832, 2
        %v1002 = vsel %vm993, %v999, %v1001
        %v1003 = vrot.slane %v833, 2
        %v1004 = vsel %vm993, %v1001, %v1003
        %v1006 = vsel %vm275, %v996, 0
        %v1009 = vsel %vm275, %v998, 0
        %v1012 = vsel %vm275, %v1000, 0
        %v1015 = vsel %vm275, %v1002, 0
        %v1018 = vsel %vm275, %v1004, 0
        %v1021 = vsel %vm291, %v989, 0
        %1023 = vmatprep.subr.bf16.mxu0 0
        %1024 = vmatpush1.bf16.msra.mxu0 0
        %1025 = vmatprep.subr.bf16.mxu0 0
        %1026 = vmatpush1.bf16.msra.mxu0 0
        %1027 = vmatprep.subr.bf16.mxu0 0
        %1028 = vmatpush1.bf16.msra.mxu0 0
        %1029 = vmatprep.subr.bf16.mxu0 0
        %1030 = vmatpush1.bf16.msra.mxu0 0
        %1031 = vmatprep.subr.bf16.mxu0 0
        %1032 = vmatpush1.bf16.msra.mxu0 0
        %1033 = vmatprep.subr.bf16.mxu0 0
        %1034 = vmatpush1.bf16.msra.mxu0 0
        %1035 = vmatprep.subr.bf16.mxu0 0
        %1036 = vmatpush1.bf16.msra.mxu0 0
        %1037 = vmatprep.subr.bf16.mxu0 0
        %1038 = vmatpush1.bf16.msra.mxu0 %v1021
        %1039 = vmatprep.subr.bf16.mxu0 0
        %1040 = vmatpush2.bf16.msra.mxu0 0
        %1041 = vmatprep.subr.bf16.mxu0 0
        %1042 = vmatpush2.bf16.msra.mxu0 0
        %1043 = vmatprep.subr.bf16.mxu0 0
        %1044 = vmatpush2.bf16.msra.mxu0 0
        %1045 = vmatprep.subr.bf16.mxu0 0
        %1046 = vmatpush2.bf16.msra.mxu0 0
        %1047 = vmatprep.subr.bf16.mxu0 0
        %1048 = vmatpush2.bf16.msra.mxu0 0
        %1049 = vmatprep.subr.bf16.mxu0 0
        %1050 = vmatpush2.bf16.msra.mxu0 0
        %1051 = vmatprep.subr.bf16.mxu0 0
        %1052 = vmatpush2.bf16.msra.mxu0 0
        %1053 = vmatprep.subr.bf16.mxu0 0
        %1054 = vmatpush2.bf16.msra.mxu0 0
        %1055 = vmatprep.mubr.bf16.mxu0 0
        %1056 = vmatmul.mubr.bf16.gmra.mxu0 %v1006
        %v1057 = vpop.f32.mrf.mxu0
        %v1058 = vadd.f32 0.0, %v1057
        %v1059 = vpop.f32.mrf.mxu0
        %v1060 = vpop.f32.mrf.mxu0
        %v1061 = vadd.f32 0.0, %v1060
        %v1062 = vpop.f32.mrf.mxu0
        %1063 = vmatprep.mubr.bf16.mxu0 0
        %1064 = vmatmul.mubr.bf16.gmra.mxu0 %v1009
        %v1065 = vpop.f32.mrf.mxu0
        %v1066 = vadd.f32 0.0, %v1065
        %v1067 = vpop.f32.mrf.mxu0
        %v1068 = vpop.f32.mrf.mxu0
        %v1069 = vadd.f32 0.0, %v1068
        %v1070 = vpop.f32.mrf.mxu0
        %1071 = vmatprep.mubr.bf16.mxu0 0
        %1072 = vmatmul.mubr.bf16.gmra.mxu0 %v1012
        %v1073 = vpop.f32.mrf.mxu0
        %v1074 = vadd.f32 0.0, %v1073
        %v1075 = vpop.f32.mrf.mxu0
        %v1076 = vpop.f32.mrf.mxu0
        %v1077 = vadd.f32 0.0, %v1076
        %v1078 = vpop.f32.mrf.mxu0
        %1079 = vmatprep.mubr.bf16.mxu0 0
        %1080 = vmatmul.mubr.bf16.gmra.mxu0 %v1015
        %v1081 = vpop.f32.mrf.mxu0
        %v1082 = vadd.f32 0.0, %v1081
        %v1083 = vpop.f32.mrf.mxu0
        %v1084 = vpop.f32.mrf.mxu0
        %v1085 = vadd.f32 0.0, %v1084
        %v1086 = vpop.f32.mrf.mxu0
        %1087 = vmatprep.mubr.bf16.mxu0 0
        %1088 = vmatmul.mubr.bf16.gmra.mxu0 %v1018
        %v1089 = vpop.f32.mrf.mxu0
        %v1090 = vadd.f32 0.0, %v1089
        %v1091 = vpop.f32.mrf.mxu0
        %v1092 = vpop.f32.mrf.mxu0
        %v1093 = vadd.f32 0.0, %v1092
        %v1094 = vpop.f32.mrf.mxu0
        %1095 = vdwg.mxu0
        %v1096 = vadd.f32 %v975, %v1058
        %v1097 = vadd.f32 %v976, %v1061
        %v1098 = vadd.f32 %v977, %v1066
        %v1099 = vadd.f32 %v978, %v1069
        %v1100 = vadd.f32 %v979, %v1074
        %v1101 = vadd.f32 %v980, %v1077
        %v1102 = vadd.f32 %v981, %v1082
        %v1103 = vadd.f32 %v982, %v1085
        %v1104 = vadd.f32 %v983, %v1090
        %v1105 = vadd.f32 %v984, %v1093
        %v1106 = vld [vmem:[%s209 + $0x8] sm:$0xc]
        %v1107 = vld [vmem:[%s209 + $0xc] sm:$0xf]
        %v1108 = vld [vmem:[%s209 + $0x10] sm:$0xf]
        %v1109 = vld [vmem:[%s209 + $0x14] sm:$0xf]
        %v1110 = vld [vmem:[%s209 + $0x18] sm:$0xf]
        %v1111 = vld [vmem:[%s209 + $0x1c] sm:$0xf]
        %v1112 = vld [vmem:[%s209 + $0x20] sm:$0xf]
        %v1113 = vld [vmem:[%s209 + $0x24] sm:$0xf]
        %v1114 = vld [vmem:[%s209 + $0x28] sm:$0xf]
        %v1115 = vld [vmem:[%s209 + $0x2c] sm:$0xf]
        %v1116 = vld [vmem:[%s209 + $0x30] sm:$0x1]
        %s1117 = sadd.s32 %s246, 6
        %s1118 = smul.addr %s1117, 2
        %s1119 = scalar_lea.vmem %s1, %s1118
        %v1120 = vld [vmem:[%s1119] sm:$0x3]
        %v1132 = vunpack.c.l.b16 %v1106
        %v1133 = vunpack.c.l.b16 %v1107
        %v1134 = vunpack.c.l.b16 %v1108
        %v1135 = vunpack.c.l.b16 %v1109
        %v1136 = vunpack.c.l.b16 %v1110
        %v1137 = vunpack.c.l.b16 %v1111
        %v1138 = vunpack.c.l.b16 %v1112
        %v1139 = vunpack.c.l.b16 %v1113
        %v1140 = vunpack.c.l.b16 %v1114
        %v1141 = vunpack.c.l.b16 %v1115
        %v1142 = vunpack.c.l.b16 %v1116
        %v1143 = vpack.c.b16 %v1133, %v1132
        %v1144 = vpack.c.b16 %v1135, %v1134
        %v1145 = vpack.c.b16 %v1137, %v1136
        %v1146 = vpack.c.b16 %v1139, %v1138
        %v1147 = vpack.c.b16 %v1141, %v1140
        %v1148 = vpack.c.b16 %v1142, %v1142
        %v1149 = vrot.slane %v1143, 2
        %v1150 = vrot.slane %v1144, 2
        %v1151 = vsel %vm993, %v1149, %v1150
        %v1152 = vrot.slane %v1145, 2
        %v1153 = vsel %vm993, %v1150, %v1152
        %v1154 = vrot.slane %v1146, 2
        %v1155 = vsel %vm993, %v1152, %v1154
        %v1156 = vrot.slane %v1147, 2
        %v1157 = vsel %vm993, %v1154, %v1156
        %v1158 = vrot.slane %v1148, 2
        %v1159 = vsel %vm993, %v1156, %v1158
        %v1161 = vsel %vm275, %v1151, 0
        %v1164 = vsel %vm275, %v1153, 0
        %v1167 = vsel %vm275, %v1155, 0
        %v1170 = vsel %vm275, %v1157, 0
        %v1173 = vsel %vm275, %v1159, 0
        %v1176 = vsel %vm291, %v1120, 0
        %1178 = vmatprep.subr.bf16.mxu0 0
        %1179 = vmatpush1.bf16.msra.mxu0 0
        %1180 = vmatprep.subr.bf16.mxu0 0
        %1181 = vmatpush1.bf16.msra.mxu0 0
        %1182 = vmatprep.subr.bf16.mxu0 0
        %1183 = vmatpush1.bf16.msra.mxu0 0
        %1184 = vmatprep.subr.bf16.mxu0 0
        %1185 = vmatpush1.bf16.msra.mxu0 0
        %1186 = vmatprep.subr.bf16.mxu0 0
        %1187 = vmatpush1.bf16.msra.mxu0 0
        %1188 = vmatprep.subr.bf16.mxu0 0
        %1189 = vmatpush1.bf16.msra.mxu0 0
        %1190 = vmatprep.subr.bf16.mxu0 0
        %1191 = vmatpush1.bf16.msra.mxu0 0
        %1192 = vmatprep.subr.bf16.mxu0 0
        %1193 = vmatpush1.bf16.msra.mxu0 %v1176
        %1194 = vmatprep.subr.bf16.mxu0 0
        %1195 = vmatpush2.bf16.msra.mxu0 0
        %1196 = vmatprep.subr.bf16.mxu0 0
        %1197 = vmatpush2.bf16.msra.mxu0 0
        %1198 = vmatprep.subr.bf16.mxu0 0
        %1199 = vmatpush2.bf16.msra.mxu0 0
        %1200 = vmatprep.subr.bf16.mxu0 0
        %1201 = vmatpush2.bf16.msra.mxu0 0
        %1202 = vmatprep.subr.bf16.mxu0 0
        %1203 = vmatpush2.bf16.msra.mxu0 0
        %1204 = vmatprep.subr.bf16.mxu0 0
        %1205 = vmatpush2.bf16.msra.mxu0 0
        %1206 = vmatprep.subr.bf16.mxu0 0
        %1207 = vmatpush2.bf16.msra.mxu0 0
        %1208 = vmatprep.subr.bf16.mxu0 0
        %1209 = vmatpush2.bf16.msra.mxu0 0
        %1210 = vmatprep.mubr.bf16.mxu0 0
        %1211 = vmatmul.mubr.bf16.gmra.mxu0 %v1161
        %v1212 = vpop.f32.mrf.mxu0
        %v1213 = vadd.f32 0.0, %v1212
        %v1214 = vpop.f32.mrf.mxu0
        %v1215 = vpop.f32.mrf.mxu0
        %v1216 = vadd.f32 0.0, %v1215
        %v1217 = vpop.f32.mrf.mxu0
        %1218 = vmatprep.mubr.bf16.mxu0 0
        %1219 = vmatmul.mubr.bf16.gmra.mxu0 %v1164
        %v1220 = vpop.f32.mrf.mxu0
        %v1221 = vadd.f32 0.0, %v1220
        %v1222 = vpop.f32.mrf.mxu0
        %v1223 = vpop.f32.mrf.mxu0
        %v1224 = vadd.f32 0.0, %v1223
        %v1225 = vpop.f32.mrf.mxu0
        %1226 = vmatprep.mubr.bf16.mxu0 0
        %1227 = vmatmul.mubr.bf16.gmra.mxu0 %v1167
        %v1228 = vpop.f32.mrf.mxu0
        %v1229 = vadd.f32 0.0, %v1228
        %v1230 = vpop.f32.mrf.mxu0
        %v1231 = vpop.f32.mrf.mxu0
        %v1232 = vadd.f32 0.0, %v1231
        %v1233 = vpop.f32.mrf.mxu0
        %1234 = vmatprep.mubr.bf16.mxu0 0
        %1235 = vmatmul.mubr.bf16.gmra.mxu0 %v1170
        %v1236 = vpop.f32.mrf.mxu0
        %v1237 = vadd.f32 0.0, %v1236
        %v1238 = vpop.f32.mrf.mxu0
        %v1239 = vpop.f32.mrf.mxu0
        %v1240 = vadd.f32 0.0, %v1239
        %v1241 = vpop.f32.mrf.mxu0
        %1242 = vmatprep.mubr.bf16.mxu0 0
        %1243 = vmatmul.mubr.bf16.gmra.mxu0 %v1173
        %v1244 = vpop.f32.mrf.mxu0
        %v1245 = vadd.f32 0.0, %v1244
        %v1246 = vpop.f32.mrf.mxu0
        %v1247 = vpop.f32.mrf.mxu0
        %v1248 = vadd.f32 0.0, %v1247
        %v1249 = vpop.f32.mrf.mxu0
        %1250 = vdwg.mxu0
        %v1251 = vadd.f32 %v1096, %v1213
        %v1252 = vadd.f32 %v1097, %v1216
        %v1253 = vadd.f32 %v1098, %v1221
        %v1254 = vadd.f32 %v1099, %v1224
        %v1255 = vadd.f32 %v1100, %v1229
        %v1256 = vadd.f32 %v1101, %v1232
        %v1257 = vadd.f32 %v1102, %v1237
        %v1258 = vadd.f32 %v1103, %v1240
        %v1259 = vadd.f32 %v1104, %v1245
        %v1260 = vadd.f32 %v1105, %v1248
        %v1261 = vld [vmem:[%s209 + $0x30] sm:$0x3]
        %s1262 = sadd.s32 %s246, 7
        %s1263 = smul.addr %s1262, 2
        %s1264 = scalar_lea.vmem %s1, %s1263
        %v1265 = vld [vmem:[%s1264] sm:$0x3]
        %v1267 = vunpack.c.l.b16 %v1261
        %v1268 = vpack.c.b16 %v1267, %v1267
        %vm1269 = vsmask.f32 5376
        %v1271 = vshrl.u32 %v1143, 16
        %v1273 = vrot.slane %v1271, 2
        %v1274 = vshll.u32 %v1143, 16
        %v1276 = vrot.slane %v1274, 3
        %v1277 = vor.u32 %v1273, %v1276
        %v1279 = vshrl.u32 %v1144, 16
        %v1281 = vrot.slane %v1279, 2
        %v1282 = vshll.u32 %v1144, 16
        %v1284 = vrot.slane %v1282, 3
        %v1285 = vor.u32 %v1281, %v1284
        %v1286 = vsel %vm1269, %v1277, %v1285
        %v1288 = vshrl.u32 %v1145, 16
        %v1290 = vrot.slane %v1288, 2
        %v1291 = vshll.u32 %v1145, 16
        %v1293 = vrot.slane %v1291, 3
        %v1294 = vor.u32 %v1290, %v1293
        %v1295 = vsel %vm1269, %v1285, %v1294
        %v1297 = vshrl.u32 %v1146, 16
        %v1299 = vrot.slane %v1297, 2
        %v1300 = vshll.u32 %v1146, 16
        %v1302 = vrot.slane %v1300, 3
        %v1303 = vor.u32 %v1299, %v1302
        %v1304 = vsel %vm1269, %v1294, %v1303
        %v1306 = vshrl.u32 %v1147, 16
        %v1308 = vrot.slane %v1306, 2
        %v1309 = vshll.u32 %v1147, 16
        %v1311 = vrot.slane %v1309, 3
        %v1312 = vor.u32 %v1308, %v1311
        %v1313 = vsel %vm1269, %v1303, %v1312
        %v1315 = vshrl.u32 %v1268, 16
        %v1317 = vrot.slane %v1315, 2
        %v1318 = vshll.u32 %v1268, 16
        %v1320 = vrot.slane %v1318, 3
        %v1321 = vor.u32 %v1317, %v1320
        %v1322 = vsel %vm1269, %v1312, %v1321
        %v1324 = vsel %vm275, %v1286, 0
        %v1327 = vsel %vm275, %v1295, 0
        %v1330 = vsel %vm275, %v1304, 0
        %v1333 = vsel %vm275, %v1313, 0
        %v1336 = vsel %vm275, %v1322, 0
        %v1339 = vsel %vm291, %v1265, 0
        %1341 = vmatprep.subr.bf16.mxu0 0
        %1342 = vmatpush1.bf16.msra.mxu0 0
        %1343 = vmatprep.subr.bf16.mxu0 0
        %1344 = vmatpush1.bf16.msra.mxu0 0
        %1345 = vmatprep.subr.bf16.mxu0 0
        %1346 = vmatpush1.bf16.msra.mxu0 0
        %1347 = vmatprep.subr.bf16.mxu0 0
        %1348 = vmatpush1.bf16.msra.mxu0 0
        %1349 = vmatprep.subr.bf16.mxu0 0
        %1350 = vmatpush1.bf16.msra.mxu0 0
        %1351 = vmatprep.subr.bf16.mxu0 0
        %1352 = vmatpush1.bf16.msra.mxu0 0
        %1353 = vmatprep.subr.bf16.mxu0 0
        %1354 = vmatpush1.bf16.msra.mxu0 0
        %1355 = vmatprep.subr.bf16.mxu0 0
        %1356 = vmatpush1.bf16.msra.mxu0 %v1339
        %1357 = vmatprep.subr.bf16.mxu0 0
        %1358 = vmatpush2.bf16.msra.mxu0 0
        %1359 = vmatprep.subr.bf16.mxu0 0
        %1360 = vmatpush2.bf16.msra.mxu0 0
        %1361 = vmatprep.subr.bf16.mxu0 0
        %1362 = vmatpush2.bf16.msra.mxu0 0
        %1363 = vmatprep.subr.bf16.mxu0 0
        %1364 = vmatpush2.bf16.msra.mxu0 0
        %1365 = vmatprep.subr.bf16.mxu0 0
        %1366 = vmatpush2.bf16.msra.mxu0 0
        %1367 = vmatprep.subr.bf16.mxu0 0
        %1368 = vmatpush2.bf16.msra.mxu0 0
        %1369 = vmatprep.subr.bf16.mxu0 0
        %1370 = vmatpush2.bf16.msra.mxu0 0
        %1371 = vmatprep.subr.bf16.mxu0 0
        %1372 = vmatpush2.bf16.msra.mxu0 0
        %1373 = vmatprep.mubr.bf16.mxu0 0
        %1374 = vmatmul.mubr.bf16.gmra.mxu0 %v1324
        %v1375 = vpop.f32.mrf.mxu0
        %v1376 = vadd.f32 0.0, %v1375
        %v1377 = vpop.f32.mrf.mxu0
        %v1378 = vpop.f32.mrf.mxu0
        %v1379 = vadd.f32 0.0, %v1378
        %v1380 = vpop.f32.mrf.mxu0
        %1381 = vmatprep.mubr.bf16.mxu0 0
        %1382 = vmatmul.mubr.bf16.gmra.mxu0 %v1327
        %v1383 = vpop.f32.mrf.mxu0
        %v1384 = vadd.f32 0.0, %v1383
        %v1385 = vpop.f32.mrf.mxu0
        %v1386 = vpop.f32.mrf.mxu0
        %v1387 = vadd.f32 0.0, %v1386
        %v1388 = vpop.f32.mrf.mxu0
        %1389 = vmatprep.mubr.bf16.mxu0 0
        %1390 = vmatmul.mubr.bf16.gmra.mxu0 %v1330
        %v1391 = vpop.f32.mrf.mxu0
        %v1392 = vadd.f32 0.0, %v1391
        %v1393 = vpop.f32.mrf.mxu0
        %v1394 = vpop.f32.mrf.mxu0
        %v1395 = vadd.f32 0.0, %v1394
        %v1396 = vpop.f32.mrf.mxu0
        %1397 = vmatprep.mubr.bf16.mxu0 0
        %1398 = vmatmul.mubr.bf16.gmra.mxu0 %v1333
        %v1399 = vpop.f32.mrf.mxu0
        %v1400 = vadd.f32 0.0, %v1399
        %v1401 = vpop.f32.mrf.mxu0
        %v1402 = vpop.f32.mrf.mxu0
        %v1403 = vadd.f32 0.0, %v1402
        %v1404 = vpop.f32.mrf.mxu0
        %1405 = vmatprep.mubr.bf16.mxu0 0
        %1406 = vmatmul.mubr.bf16.gmra.mxu0 %v1336
        %v1407 = vpop.f32.mrf.mxu0
        %v1408 = vadd.f32 0.0, %v1407
        %v1409 = vpop.f32.mrf.mxu0
        %v1410 = vpop.f32.mrf.mxu0
        %v1411 = vadd.f32 0.0, %v1410
        %v1412 = vpop.f32.mrf.mxu0
        %1413 = vdwg.mxu0
        %v1414 = vadd.f32 %v1251, %v1376
        %v1415 = vadd.f32 %v1252, %v1379
        %v1416 = vadd.f32 %v1253, %v1384
        %v1417 = vadd.f32 %v1254, %v1387
        %v1418 = vadd.f32 %v1255, %v1392
        %v1419 = vadd.f32 %v1256, %v1395
        %v1420 = vadd.f32 %v1257, %v1400
        %v1421 = vadd.f32 %v1258, %v1403
        %v1422 = vadd.f32 %v1259, %v1408
        %v1423 = vadd.f32 %v1260, %v1411
        %v1424 = vld [vmem:[%s209 + $0x8] sm:$0x8]
        %s1425 = sadd.s32 %s246, 8
        %s1426 = smul.addr %s1425, 2
        %s1427 = scalar_lea.vmem %s1, %s1426
        %v1428 = vld [vmem:[%s1427] sm:$0x3]
        %v1430 = vunpack.c.l.b16 %v1424
        %v1431 = vpack.c.b16 %v1133, %v1430
        %vm1432 = vcmask 1044480
        %v1433 = vrot.slane %v1431, 3
        %v1434 = vrot.slane %v1144, 3
        %v1435 = vsel %vm1432, %v1433, %v1434
        %v1436 = vrot.slane %v1145, 3
        %v1437 = vsel %vm1432, %v1434, %v1436
        %v1438 = vrot.slane %v1146, 3
        %v1439 = vsel %vm1432, %v1436, %v1438
        %v1440 = vrot.slane %v1147, 3
        %v1441 = vsel %vm1432, %v1438, %v1440
        %v1442 = vrot.slane %v1268, 3
        %v1443 = vsel %vm1432, %v1440, %v1442
        %v1445 = vsel %vm275, %v1435, 0
        %v1448 = vsel %vm275, %v1437, 0
        %v1451 = vsel %vm275, %v1439, 0
        %v1454 = vsel %vm275, %v1441, 0
        %v1457 = vsel %vm275, %v1443, 0
        %v1460 = vsel %vm291, %v1428, 0
        %1462 = vmatprep.subr.bf16.mxu0 0
        %1463 = vmatpush1.bf16.msra.mxu0 0
        %1464 = vmatprep.subr.bf16.mxu0 0
        %1465 = vmatpush1.bf16.msra.mxu0 0
        %1466 = vmatprep.subr.bf16.mxu0 0
        %1467 = vmatpush1.bf16.msra.mxu0 0
        %1468 = vmatprep.subr.bf16.mxu0 0
        %1469 = vmatpush1.bf16.msra.mxu0 0
        %1470 = vmatprep.subr.bf16.mxu0 0
        %1471 = vmatpush1.bf16.msra.mxu0 0
        %1472 = vmatprep.subr.bf16.mxu0 0
        %1473 = vmatpush1.bf16.msra.mxu0 0
        %1474 = vmatprep.subr.bf16.mxu0 0
        %1475 = vmatpush1.bf16.msra.mxu0 0
        %1476 = vmatprep.subr.bf16.mxu0 0
        %1477 = vmatpush1.bf16.msra.mxu0 %v1460
        %1478 = vmatprep.subr.bf16.mxu0 0
        %1479 = vmatpush2.bf16.msra.mxu0 0
        %1480 = vmatprep.subr.bf16.mxu0 0
        %1481 = vmatpush2.bf16.msra.mxu0 0
        %1482 = vmatprep.subr.bf16.mxu0 0
        %1483 = vmatpush2.bf16.msra.mxu0 0
        %1484 = vmatprep.subr.bf16.mxu0 0
        %1485 = vmatpush2.bf16.msra.mxu0 0
        %1486 = vmatprep.subr.bf16.mxu0 0
        %1487 = vmatpush2.bf16.msra.mxu0 0
        %1488 = vmatprep.subr.bf16.mxu0 0
        %1489 = vmatpush2.bf16.msra.mxu0 0
        %1490 = vmatprep.subr.bf16.mxu0 0
        %1491 = vmatpush2.bf16.msra.mxu0 0
        %1492 = vmatprep.subr.bf16.mxu0 0
        %1493 = vmatpush2.bf16.msra.mxu0 0
        %1494 = vmatprep.mubr.bf16.mxu0 0
        %1495 = vmatmul.mubr.bf16.gmra.mxu0 %v1445
        %v1496 = vpop.f32.mrf.mxu0
        %v1497 = vadd.f32 0.0, %v1496
        %v1498 = vpop.f32.mrf.mxu0
        %v1499 = vpop.f32.mrf.mxu0
        %v1500 = vadd.f32 0.0, %v1499
        %v1501 = vpop.f32.mrf.mxu0
        %1502 = vmatprep.mubr.bf16.mxu0 0
        %1503 = vmatmul.mubr.bf16.gmra.mxu0 %v1448
        %v1504 = vpop.f32.mrf.mxu0
        %v1505 = vadd.f32 0.0, %v1504
        %v1506 = vpop.f32.mrf.mxu0
        %v1507 = vpop.f32.mrf.mxu0
        %v1508 = vadd.f32 0.0, %v1507
        %v1509 = vpop.f32.mrf.mxu0
        %1510 = vmatprep.mubr.bf16.mxu0 0
        %1511 = vmatmul.mubr.bf16.gmra.mxu0 %v1451
        %v1512 = vpop.f32.mrf.mxu0
        %v1513 = vadd.f32 0.0, %v1512
        %v1514 = vpop.f32.mrf.mxu0
        %v1515 = vpop.f32.mrf.mxu0
        %v1516 = vadd.f32 0.0, %v1515
        %v1517 = vpop.f32.mrf.mxu0
        %1518 = vmatprep.mubr.bf16.mxu0 0
        %1519 = vmatmul.mubr.bf16.gmra.mxu0 %v1454
        %v1520 = vpop.f32.mrf.mxu0
        %v1521 = vadd.f32 0.0, %v1520
        %v1522 = vpop.f32.mrf.mxu0
        %v1523 = vpop.f32.mrf.mxu0
        %v1524 = vadd.f32 0.0, %v1523
        %v1525 = vpop.f32.mrf.mxu0
        %1526 = vmatprep.mubr.bf16.mxu0 0
        %1527 = vmatmul.mubr.bf16.gmra.mxu0 %v1457
        %v1528 = vpop.f32.mrf.mxu0
        %v1529 = vadd.f32 0.0, %v1528
        %v1530 = vpop.f32.mrf.mxu0
        %v1531 = vpop.f32.mrf.mxu0
        %v1532 = vadd.f32 0.0, %v1531
        %v1533 = vpop.f32.mrf.mxu0
        %1534 = vdwg.mxu0
        %v1535 = vadd.f32 %v1414, %v1497
        %v1536 = vadd.f32 %v1415, %v1500
        %v1537 = vadd.f32 %v1416, %v1505
        %v1538 = vadd.f32 %v1417, %v1508
        %v1539 = vadd.f32 %v1418, %v1513
        %v1540 = vadd.f32 %v1419, %v1516
        %v1541 = vadd.f32 %v1420, %v1521
        %v1542 = vadd.f32 %v1421, %v1524
        %v1543 = vadd.f32 %v1422, %v1529
        %v1544 = vadd.f32 %v1423, %v1532
        %1545 = vst [vmem:[#allocation2] sm:$0xff] %v1535
        %1546 = vst [vmem:[#allocation2 + $0x8] sm:$0xff] %v1536
        %1547 = vst [vmem:[#allocation2 + $0x10] sm:$0xff] %v1537
        %1548 = vst [vmem:[#allocation2 + $0x18] sm:$0xff] %v1538
        %1549 = vst [vmem:[#allocation2 + $0x20] sm:$0xff] %v1539
        %1550 = vst [vmem:[#allocation2 + $0x28] sm:$0xff] %v1540
        %1551 = vst [vmem:[#allocation2 + $0x30] sm:$0xff] %v1541
        %1552 = vst [vmem:[#allocation2 + $0x38] sm:$0xff] %v1542
        %1553 = vst [vmem:[#allocation2 + $0x40] sm:$0xff] %v1543
        %1554 = vst [vmem:[#allocation2 + $0x48] sm:$0x3f] %v1544
        %p1555 = scmp.eq.s32.totalorder %s24, 2
        // Predicated region
        $region37: #{tpu_custom_call.1} parent=31 // pred_check
          %p1556 = pneg %p1555
        $region38: #{tpu_custom_call.1} parent=31 // pred_check_branch
          %1558 = sbr.rel (%p1556) target = $region40
        $region39: #{tpu_custom_call.1} parent=31 // pred_region
          %v1559 = vld [vmem:[#allocation2] sm:$0xff]
          %v1560 = vld [vmem:[%s2] sm:$0x1]
          %v1562 = vlaneseq
          %v1563 = vshrl.u32 %v1562, 7
          %v1564 = vsub.s32 0, %v1563
          %v1565 = vrot.slane %v1560, %v1564
          %v1567 = vadd.f32 %v1559, %v1565
          %v1568 = vmax.f32 %v1567, 0.0
          %v1569 = vpack.c.bf16 %v1568, %v1568
          %1570 = vst [vmem:[%s199] sm:$0xf] %v1569
          %v1571 = vld [vmem:[#allocation2 + $0xa] sm:$0xff]
          %v1572 = vld [vmem:[%s2] sm:$0x1]
          %v1574 = vlaneseq
          %v1575 = vshrl.u32 %v1574, 7
          %v1576 = vsub.s32 0, %v1575
          %v1577 = vrot.slane %v1572, %v1576
          %v1579 = vadd.f32 %v1571, %v1577
          %v1580 = vmax.f32 %v1579, 0.0
          %v1581 = vpack.c.bf16 %v1580, %v1580
          %s1582 = scalar_lea.vmem %s199, 4 [#allocation3]
          %1583 = vst [vmem:[%s1582] sm:$0xf] %v1581
          %v1584 = vld [vmem:[#allocation2 + $0x14] sm:$0xff]
          %v1585 = vld [vmem:[%s2] sm:$0x1]
          %v1587 = vlaneseq
          %v1588 = vshrl.u32 %v1587, 7
          %v1589 = vsub.s32 0, %v1588
          %v1590 = vrot.slane %v1585, %v1589
          %v1592 = vadd.f32 %v1584, %v1590
          %v1593 = vmax.f32 %v1592, 0.0
          %v1594 = vpack.c.bf16 %v1593, %v1593
          %s1595 = scalar_lea.vmem %s199, 8 [#allocation3]
          %1596 = vst [vmem:[%s1595] sm:$0xf] %v1594
          %v1597 = vld [vmem:[#allocation2 + $0x1e] sm:$0xff]
          %v1598 = vld [vmem:[%s2] sm:$0x1]
          %v1600 = vlaneseq
          %v1601 = vshrl.u32 %v1600, 7
          %v1602 = vsub.s32 0, %v1601
          %v1603 = vrot.slane %v1598, %v1602
          %v1605 = vadd.f32 %v1597, %v1603
          %v1606 = vmax.f32 %v1605, 0.0
          %v1607 = vpack.c.bf16 %v1606, %v1606
          %s1608 = scalar_lea.vmem %s199, 12 [#allocation3]
          %1609 = vst [vmem:[%s1608] sm:$0xf] %v1607
          %v1610 = vld [vmem:[#allocation2 + $0x28] sm:$0xff]
          %v1611 = vld [vmem:[%s2] sm:$0x1]
          %v1613 = vlaneseq
          %v1614 = vshrl.u32 %v1613, 7
          %v1615 = vsub.s32 0, %v1614
          %v1616 = vrot.slane %v1611, %v1615
          %v1618 = vadd.f32 %v1610, %v1616
          %v1619 = vmax.f32 %v1618, 0.0
          %v1620 = vpack.c.bf16 %v1619, %v1619
          %s1621 = scalar_lea.vmem %s199, 16 [#allocation3]
          %1622 = vst [vmem:[%s1621] sm:$0xf] %v1620
          %v1623 = vld [vmem:[#allocation2 + $0x32] sm:$0xff]
          %v1624 = vld [vmem:[%s2] sm:$0x1]
          %v1626 = vlaneseq
          %v1627 = vshrl.u32 %v1626, 7
          %v1628 = vsub.s32 0, %v1627
          %v1629 = vrot.slane %v1624, %v1628
          %v1631 = vadd.f32 %v1623, %v1629
          %v1632 = vmax.f32 %v1631, 0.0
          %v1633 = vpack.c.bf16 %v1632, %v1632
          %s1634 = scalar_lea.vmem %s199, 20 [#allocation3]
          %1635 = vst [vmem:[%s1634] sm:$0xf] %v1633
          %v1636 = vld [vmem:[#allocation2 + $0x3c] sm:$0xff]
          %v1637 = vld [vmem:[%s2] sm:$0x1]
          %v1639 = vlaneseq
          %v1640 = vshrl.u32 %v1639, 7
          %v1641 = vsub.s32 0, %v1640
          %v1642 = vrot.slane %v1637, %v1641
          %v1644 = vadd.f32 %v1636, %v1642
          %v1645 = vmax.f32 %v1644, 0.0
          %v1646 = vpack.c.bf16 %v1645, %v1645
          %s1647 = scalar_lea.vmem %s199, 24 [#allocation3]
          %1648 = vst [vmem:[%s1647] sm:$0xf] %v1646
          %v1649 = vld [vmem:[#allocation2 + $0x46] sm:$0xff]
          %v1650 = vld [vmem:[%s2] sm:$0x1]
          %v1652 = vlaneseq
          %v1653 = vshrl.u32 %v1652, 7
          %v1654 = vsub.s32 0, %v1653
          %v1655 = vrot.slane %v1650, %v1654
          %v1657 = vadd.f32 %v1649, %v1655
          %v1658 = vmax.f32 %v1657, 0.0
          %v1659 = vpack.c.bf16 %v1658, %v1658
          %s1660 = scalar_lea.vmem %s199, 28 [#allocation3]
          %1661 = vst [vmem:[%s1660] sm:$0xf] %v1659
        $region40: #{tpu_custom_call.1} parent=31 // pred_fallthru
          _
        %s1662 = sand.u32 %s118, 1
        %s1663 = scalar_lea.sflag [#allocation4], %s1662
        %s1664 = sand.u32 %s118, 1
        %s1665 = smul.addr %s1664, 32
        %s1666 = scalar_lea.vmem [#allocation3], %s1665
        // Predicated region
        $region41: #{tpu_custom_call.1} parent=31 // pred_check
          %p1667 = pneg %p128
        $region42: #{tpu_custom_call.1} parent=31 // pred_check_branch
          %1669 = sbr.rel (%p1667) target = $region44
        $region43: #{tpu_custom_call.1} parent=31 // pred_region
          %s1671 = ssub.s32 512, 512
          %1672 = vsyncadd %s1663, %s1671
          %s1673 = smul.addr %s23, 8
          %s1674 = smul.addr %s22, 64
          %s1675 = sadd.s32 %s1673, %s1674
          %s1676 = smul.addr %s1675, 64
          %s1677 = scalar_lea.hbm %s3, %s1676
          %s1678 = sshll.u32 %s1666, 4
          %s1679 = int_to_ptr.vmem [resolvable:$true] %s1678
          %1684 = dma.vmem_to_hbm [thread:$0]  %s1679, 512, %s1677, %s1663, 64, 64, 4
        $region44: #{tpu_custom_call.1} parent=31 // pred_fallthru
          _
      $region32: #{tpu_custom_call.1} parent=5 // pred_fallthru
        _
      %p1685 = scmp.le.s32.totalorder 2, %s12
      // Predicated region
      $region45: #{tpu_custom_call.1} parent=5 // pred_check
        %p1686 = pneg %p1685
      $region46: #{tpu_custom_call.1} parent=5 // pred_check_branch
        %1688 = sbr.rel (%p1686) target = $region48
      $region47: #{tpu_custom_call.1} parent=5 // pred_region
        %s1689 = ssub.s32 %s12, 2
        // Predicated region
        $region49: #{tpu_custom_call.1} parent=47 // pred_check
          %p1690 = pneg %p134
        $region50: #{tpu_custom_call.1} parent=47 // pred_check_branch
          %1692 = sbr.rel (%p1690) target = $region52
        $region51: #{tpu_custom_call.1} parent=47 // pred_region
          %s1693 = sand.u32 %s119, 1
          %s1694 = scalar_lea.sflag [#allocation4], %s1693
          %s1695 = sand.u32 %s119, 1
          %s1696 = smul.addr %s1695, 32
          %s1697 = scalar_lea.vmem [#allocation3], %s1696
          %1698 = dma.done %s1694, 512
        $region52: #{tpu_custom_call.1} parent=47 // pred_fallthru
          _
      $region48: #{tpu_custom_call.1} parent=5 // pred_fallthru
        _
    $region6: #{tpu_custom_call.1} parent=1 // loop_footer
      %s16 = sadd.s32 1, %s12
    $region7: #{tpu_custom_call.1} parent=1 // loop_footer_branch
      %11 = sbr.rel target = $region3
    $region8: #{tpu_custom_call.1} parent=1 // loop_exit
      _
    %1699 = vsyncpa [#allocation4], 1
    %s1700 = scalar_lea.sflag [#allocation4], 1
    %1701 = vsyncpa %s1700, 1

</llo_original>
